<compile_context>
chip_gen: v7x
topology: tpu7x:2x2x1
jax: 0.10.0
libtpu: 0.0.40
codegen_flags: <defaults>
</compile_context>

<pallas_src>
import functools

import jax
import jax.numpy as jnp
from jax.experimental import pallas as pl
from jax.experimental.pallas import tpu as pltpu


def _elementwise_feat_dtype():
    """bf16 elementwise only where the VPU is bf16-native (v6e / v7x); f32 elsewhere."""
    try:
        kind = jax.devices()[0].device_kind.lower()
    except Exception:
        return jnp.float32
    if any(tag in kind for tag in ("v6", "v7", "7x")):
        return jnp.bfloat16
    return jnp.float32


def decoder_kernel(a_ref, o_ref, rep_a_ref, rep_o_ref, w1_ref, b1_ref, w2_ref, b2_ref,
                   ones_ref, sel_bd_ref, sel_bdt_ref, sel_bt_ref, sel_btt_ref,
                   out_ref, *, ans_k, feat_dtype):
    f32 = jnp.float32
    bf16 = jnp.bfloat16

    BTD, AS = a_ref.shape            # (B*T*D, AS)  -- A already in (B,T,D,AS) order
    BT, _H = o_ref.shape             # (B*T, H)
    B, D = out_ref.shape
    T = BT // B

    a_flat = a_ref[...]              # (BTD, AS) f32

    # ---- lane-dense `feat` built on the (idle) MXU -----------------------------
    #   feat[(b,t,d), a*H + h] = A[b,t,a,d] * o[b,t,h]
    a_rep = jnp.dot(a_flat.astype(bf16), rep_a_ref[...],
                    preferred_element_type=feat_dtype)              # (BTD, AS*H)
    o_rep = jnp.dot(o_ref[...], rep_o_ref[...],
                    preferred_element_type=f32)                      # (BT,  AS*H)
    o_full = jnp.dot(sel_btt_ref[...], o_rep,
                     preferred_element_type=f32)                     # (BTD, AS*H)
    feat = (a_rep * o_full.astype(feat_dtype)).astype(bf16)          # (BTD, AS*H) bf16

    # ---- sampledown: Linear -> ReLU -> Linear -> ReLU (bf16 MXU, f32 accumulate)
    z1 = jnp.dot(feat, w1_ref[...], preferred_element_type=f32) + b1_ref[...]
    z1 = jnp.maximum(z1, 0.0)                                        # (BTD, hidden)
    z2 = jnp.dot(z1.astype(bf16), w2_ref[...], preferred_element_type=f32) + b2_ref[...]
    z2 = jnp.maximum(z2, 0.0)                                        # (BTD, AS) f32

    ones_as = ones_ref[...]          # (AS, 1)     f32
    sel_bd = sel_bd_ref[...]         # (B*D, BTD)  1 iff row n belongs to (b, *, d)
    sel_bdt = sel_bdt_ref[...]       # (BTD, B*D)
    sel_bt = sel_bt_ref[...]         # (B*T, BTD)  1 iff row n belongs to (b, t, *)
    sel_btt = sel_btt_ref[...]       # (BTD, B*T)

    # ---- answer softmax over AS (torch: softmax(x.permute(...), dim=dim_words)) -
    m = jnp.max(z2, axis=-1, keepdims=True)
    e = jnp.exp(z2 - m)
    denom = jnp.dot(e, ones_as, preferred_element_type=f32)          # (BTD, 1) on MXU
    attn = e * pl.reciprocal(denom, approx=True)                     # (BTD, AS)

    # ---- oa_sum[b,d] = sum_{t,a} A * attn  (segment sums on the MXU) ------------
    oa_row = jnp.dot(a_flat * attn, ones_as, preferred_element_type=f32)   # (BTD, 1)
    oa_bd = jnp.dot(sel_bd, oa_row, preferred_element_type=f32)            # (B*D, 1)

    # ---- p = softmax over D (exact, tiny) + /p_sum; A2 = A * p[b,d] -------------
    oa2 = oa_bd.reshape(B, D)
    pm = jnp.max(oa2, axis=-1, keepdims=True)
    pe = jnp.exp(oa2 - pm)
    p = pe / jnp.sum(pe, axis=-1, keepdims=True)
    p = p / jnp.sum(p, axis=-1, keepdims=True)                       # reference's /p_sum
    pscale_rows = jnp.dot(sel_bdt, p.reshape(B * D, 1),
                          preferred_element_type=f32)                # (BTD, 1)
    A2 = a_flat * pscale_rows                                        # (BTD, AS)

    # ---- self_attention(ans_k): Y = A2 * sum_D(A2); S = softmax over words (T) --
    dsum_bt = jnp.dot(sel_bt, A2, preferred_element_type=f32)        # (B*T, AS)
    dsum = jnp.dot(sel_btt, dsum_bt, preferred_element_type=f32)     # (BTD, AS)
    Y = A2 * dsum

    Y4 = Y.reshape(B, T, D, AS)                                      # tile-aligned (free) view
    sm = jnp.max(Y4, axis=1, keepdims=True)                          # across-vreg VPU maxes
    se = jnp.exp(Y4 - sm)
    S = (se / jnp.sum(se, axis=1, keepdims=True)).reshape(BTD, AS)   # exact (S is squared below)

    res = A2
    for _ in range(max(1, ans_k)):                                   # res = A2 * S**max(1,ans_k)
        res = res * S

    # ---- out[b,d] = sum_{t,a} res  (MXU again) ----------------------------------
    res_row = jnp.dot(res, ones_as, preferred_element_type=f32)      # (BTD, 1)
    out_bd = jnp.dot(sel_bd, res_row, preferred_element_type=f32)    # (B*D, 1)
    out_ref[...] = out_bd.reshape(B, D)


def decoder_forward(o, A, params, *, ans_k=2):
    """o: (B, T, H) f32, A: (B, T, AS, D) f32 -> (B, D) f32."""
    B, T, H = o.shape
    _, _, AS, D = A.shape
    w1, b1, w2, b2 = params          # torch Linear layout: w1 (hidden, AS*H), w2 (AS, hidden)
    hidden = w1.shape[0]
    f32, bf16 = jnp.float32, jnp.bfloat16

    # Layout work hoisted out of the kernel (XLA folds it into producers):
    #   A -> (B,T,D,AS) -> (B*T*D, AS);   o -> (B*T, H)
    a_flat = jnp.transpose(jnp.asarray(A, f32), (0, 1, 3, 2)).reshape(B * T * D, AS)
    o2 = jnp.asarray(o, f32).reshape(B * T, H)

    # Weights pre-transposed to (in, out) and pre-cast to bf16 (MXU-native operands).
    w1t = jnp.asarray(w1).T.astype(bf16)                             # (AS*H, hidden)
    w2t = jnp.asarray(w2).T.astype(bf16)                             # (hidden, AS)
    b1r = jnp.asarray(b1, f32).reshape(1, hidden)
    b2r = jnp.asarray(b2, f32).reshape(1, AS)

    # Constant 0/1 replication & segment-selector matrices (built once, outside the
    # kernel) so every replicate / segment-sum inside the kernel is an MXU matmul.
    c = jnp.arange(AS * H)
    rep_a = (jnp.arange(AS)[:, None] == c[None, :] // H).astype(bf16)       # (AS, AS*H)
    rep_o = (jnp.arange(H)[:, None] == c[None, :] % H).astype(f32)          # (H,  AS*H)

    n = jnp.arange(B * T * D)
    bd = jnp.arange(B * D)
    sel_bd = (((n[None, :] // (T * D)) == bd[:, None] // D)
              & ((n[None, :] % D) == bd[:, None] % D)).astype(f32)          # (B*D, BTD)
    bt = jnp.arange(B * T)
    sel_bt = ((n[None, :] // D) == bt[:, None]).astype(f32)                 # (B*T, BTD)
    ones_as = jnp.ones((AS, 1), f32)

    kernel = functools.partial(decoder_kernel, ans_k=ans_k,
                               feat_dtype=_elementwise_feat_dtype())
    vmem = pl.BlockSpec(memory_space=pltpu.MemorySpace.VMEM)
    # No grid: single invocation, whole (tiny) arrays resident in VMEM, no pipeline
    # scaffolding / double buffering.
    return pl.pallas_call(
        kernel,
        out_shape=jax.ShapeDtypeStruct((B, D), f32),
        in_specs=[vmem] * 13,
        out_specs=vmem,
    )(a_flat, o2, rep_a, rep_o, w1t, b1r, w2t, b2r,
      ones_as, sel_bd, sel_bd.T, sel_bt, sel_bt.T)


def decoder_reference(o, A, params, *, ans_k=2, dim_words=2):
    """Pure-JAX f32 mirror of the PyTorch forward (correctness check)."""
    w1, b1, w2, b2 = params
    B, T, H = o.shape
    _, _, AS, D = A.shape
    x = o[:, :, None, :, None] * A[:, :, :, None, :]            # (B,T,AS,H,D)
    x = x.reshape(B, T, AS * H, D)
    xp = jnp.transpose(x, (0, 1, 3, 2))                          # (B,T,D,AS*H)
    z1 = jax.nn.relu(xp @ w1.T + b1)
    z2 = jax.nn.relu(z1 @ w2.T + b2)                             # (B,T,D,AS)
    a_att = jax.nn.softmax(jnp.transpose(z2, (0, 1, 3, 2)), axis=dim_words)
    oa = A * a_att
    oa = jnp.sum(oa.reshape(B, -1, D), axis=1)                   # (B,D)
    p = jax.nn.softmax(oa, axis=1)
    p_sum = jnp.sum(p, axis=1, keepdims=True)
    A2 = A * p[:, None, None, :] / p_sum[:, None, None, :]
    Y = A2 * jnp.sum(A2, axis=dim_words + 1, keepdims=True)
    S = jax.nn.softmax(Y, axis=1)                                # torch implicit dim for 4-D = 1
    res = A2
    for _ in range(max(1, ans_k)):
        res = res * S
    return jnp.sum(jnp.sum(res, axis=1), axis=1)                 # (B,D)


if __name__ == "__main__":
    # Synthetic config
    B, T = 2, 8
    A_SIZE, H_SIZE, HIDDEN, D = 8, 16, 32, 8
    ANS_K = 2

    key = jax.random.PRNGKey(0)
    k_o, k_a, k_w1, k_b1, k_w2, k_b2 = jax.random.split(key, 6)

    # TODO(synk): the torch forward starts with o.squeeze(); we assume o arrives as (B,T,H).
    o = jax.random.normal(k_o, (B, T, H_SIZE), dtype=jnp.float32)
    A = jax.random.normal(k_a, (B, T, A_SIZE, D), dtype=jnp.float32)

    # torch Linear shapes: weight (out, in), bias (out,)
    w1 = 0.05 * jax.random.normal(k_w1, (HIDDEN, A_SIZE * H_SIZE), dtype=jnp.float32)
    b1 = 0.05 * jax.random.normal(k_b1, (HIDDEN,), dtype=jnp.float32)
    w2 = 0.05 * jax.random.normal(k_w2, (A_SIZE, HIDDEN), dtype=jnp.float32)
    b2 = 0.05 * jax.random.normal(k_b2, (A_SIZE,), dtype=jnp.float32)
    params = (w1, b1, w2, b2)

    out = jax.block_until_ready(decoder_forward(o, A, params, ans_k=ANS_K))
    ref = jax.block_until_ready(decoder_reference(o, A, params, ans_k=ANS_K))

    assert out.shape == (B, D), out.shape
    # Tolerance accounts for bf16 MXU operands (feat / sampledown / reduction matmuls)
    # and the approx-reciprocal answer-softmax denominator vs the pure-f32 reference.
    assert jnp.allclose(out, ref, atol=5e-3, rtol=5e-2), (out, ref)

    print("KERNEL_OK")
</pallas_src>

<mosaic_0001>
module attributes {stable_mosaic.version = 11 : i64} {
  func.func @decoder_kernel(%arg0: memref<128x8xf32, #tpu.memory_space<vmem>>, %arg1: memref<16x16xf32, #tpu.memory_space<vmem>>, %arg2: memref<8x128xbf16, #tpu.memory_space<vmem>>, %arg3: memref<16x128xf32, #tpu.memory_space<vmem>>, %arg4: memref<128x32xbf16, #tpu.memory_space<vmem>>, %arg5: memref<1x32xf32, #tpu.memory_space<vmem>>, %arg6: memref<32x8xbf16, #tpu.memory_space<vmem>>, %arg7: memref<1x8xf32, #tpu.memory_space<vmem>>, %arg8: memref<8x1xf32, #tpu.memory_space<vmem>>, %arg9: memref<16x128xf32, #tpu.memory_space<vmem>>, %arg10: memref<128x16xf32, #tpu.memory_space<vmem>>, %arg11: memref<16x128xf32, #tpu.memory_space<vmem>>, %arg12: memref<128x16xf32, #tpu.memory_space<vmem>>, %arg13: memref<2x8xf32, #tpu.memory_space<vmem>>) attributes {dimension_semantics = [], scalar_prefetch = 0 : i64, scratch_operands = 0 : i64, tpu.core_type = #tpu.core_type<tc>} {
    %c0 = arith.constant 0 : index
    %c0_0 = arith.constant 0 : index
    %0 = vector.load %arg0[%c0, %c0_0] : memref<128x8xf32, #tpu.memory_space<vmem>>, vector<128x8xf32>
    %1 = arith.truncf %0 : vector<128x8xf32> to vector<128x8xbf16>
    %c0_1 = arith.constant 0 : index
    %c0_2 = arith.constant 0 : index
    %2 = vector.load %arg2[%c0_1, %c0_2] : memref<8x128xbf16, #tpu.memory_space<vmem>>, vector<8x128xbf16>
    %cst = arith.constant dense<0.000000e+00> : vector<128x128xf32>
    %3 = tpu.matmul %1, %2, %cst {dimension_numbers = #tpu.dot_dimension_numbers<[1], [0], [0], [1], [0, 0, 1, 1], [], []>} : vector<128x8xbf16>, vector<8x128xbf16>, vector<128x128xf32> -> vector<128x128xf32>
    %c0_3 = arith.constant 0 : index
    %c0_4 = arith.constant 0 : index
    %4 = vector.load %arg1[%c0_3, %c0_4] : memref<16x16xf32, #tpu.memory_space<vmem>>, vector<16x16xf32>
    %c0_5 = arith.constant 0 : index
    %c0_6 = arith.constant 0 : index
    %5 = vector.load %arg3[%c0_5, %c0_6] : memref<16x128xf32, #tpu.memory_space<vmem>>, vector<16x128xf32>
    %cst_7 = arith.constant dense<0.000000e+00> : vector<16x128xf32>
    %6 = tpu.matmul %4, %5, %cst_7 {dimension_numbers = #tpu.dot_dimension_numbers<[1], [0], [0], [1], [0, 0, 1, 1], [], []>} : vector<16x16xf32>, vector<16x128xf32>, vector<16x128xf32> -> vector<16x128xf32>
    %c0_8 = arith.constant 0 : index
    %c0_9 = arith.constant 0 : index
    %7 = vector.load %arg12[%c0_8, %c0_9] : memref<128x16xf32, #tpu.memory_space<vmem>>, vector<128x16xf32>
    %cst_10 = arith.constant dense<0.000000e+00> : vector<128x128xf32>
    %8 = tpu.matmul %7, %6, %cst_10 {dimension_numbers = #tpu.dot_dimension_numbers<[1], [0], [0], [1], [0, 0, 1, 1], [], []>} : vector<128x16xf32>, vector<16x128xf32>, vector<128x128xf32> -> vector<128x128xf32>
    %9 = arith.mulf %3, %8 : vector<128x128xf32>
    %10 = arith.truncf %9 : vector<128x128xf32> to vector<128x128xbf16>
    %c0_11 = arith.constant 0 : index
    %c0_12 = arith.constant 0 : index
    %11 = vector.load %arg4[%c0_11, %c0_12] : memref<128x32xbf16, #tpu.memory_space<vmem>>, vector<128x32xbf16>
    %cst_13 = arith.constant dense<0.000000e+00> : vector<128x32xf32>
    %12 = tpu.matmul %10, %11, %cst_13 {dimension_numbers = #tpu.dot_dimension_numbers<[1], [0], [0], [1], [0, 0, 1, 1], [], []>} : vector<128x128xbf16>, vector<128x32xbf16>, vector<128x32xf32> -> vector<128x32xf32>
    %c0_14 = arith.constant 0 : index
    %c0_15 = arith.constant 0 : index
    %13 = vector.load %arg5[%c0_14, %c0_15] : memref<1x32xf32, #tpu.memory_space<vmem>>, vector<1x32xf32>
    %14 = vector.broadcast %13 : vector<1x32xf32> to vector<128x32xf32>
    %15 = arith.addf %12, %14 : vector<128x32xf32>
    %cst_16 = arith.constant 0.000000e+00 : f32
    %16 = vector.broadcast %cst_16 : f32 to vector<128x32xf32>
    %17 = arith.maximumf %15, %16 : vector<128x32xf32>
    %18 = arith.truncf %17 : vector<128x32xf32> to vector<128x32xbf16>
    %c0_17 = arith.constant 0 : index
    %c0_18 = arith.constant 0 : index
    %19 = vector.load %arg6[%c0_17, %c0_18] : memref<32x8xbf16, #tpu.memory_space<vmem>>, vector<32x8xbf16>
    %cst_19 = arith.constant dense<0.000000e+00> : vector<128x8xf32>
    %20 = tpu.matmul %18, %19, %cst_19 {dimension_numbers = #tpu.dot_dimension_numbers<[1], [0], [0], [1], [0, 0, 1, 1], [], []>} : vector<128x32xbf16>, vector<32x8xbf16>, vector<128x8xf32> -> vector<128x8xf32>
    %c0_20 = arith.constant 0 : index
    %c0_21 = arith.constant 0 : index
    %21 = vector.load %arg7[%c0_20, %c0_21] : memref<1x8xf32, #tpu.memory_space<vmem>>, vector<1x8xf32>
    %22 = vector.broadcast %21 : vector<1x8xf32> to vector<128x8xf32>
    %23 = arith.addf %20, %22 : vector<128x8xf32>
    %cst_22 = arith.constant 0.000000e+00 : f32
    %24 = vector.broadcast %cst_22 : f32 to vector<128x8xf32>
    %25 = arith.maximumf %23, %24 : vector<128x8xf32>
    %c0_23 = arith.constant 0 : index
    %c0_24 = arith.constant 0 : index
    %26 = vector.load %arg8[%c0_23, %c0_24] : memref<8x1xf32, #tpu.memory_space<vmem>>, vector<8x1xf32>
    %c0_25 = arith.constant 0 : index
    %c0_26 = arith.constant 0 : index
    %27 = vector.load %arg9[%c0_25, %c0_26] : memref<16x128xf32, #tpu.memory_space<vmem>>, vector<16x128xf32>
    %c0_27 = arith.constant 0 : index
    %c0_28 = arith.constant 0 : index
    %28 = vector.load %arg10[%c0_27, %c0_28] : memref<128x16xf32, #tpu.memory_space<vmem>>, vector<128x16xf32>
    %c0_29 = arith.constant 0 : index
    %c0_30 = arith.constant 0 : index
    %29 = vector.load %arg11[%c0_29, %c0_30] : memref<16x128xf32, #tpu.memory_space<vmem>>, vector<16x128xf32>
    %c0_31 = arith.constant 0 : index
    %c0_32 = arith.constant 0 : index
    %30 = vector.load %arg12[%c0_31, %c0_32] : memref<128x16xf32, #tpu.memory_space<vmem>>, vector<128x16xf32>
    %cst_33 = arith.constant dense<0xFF800000> : vector<128xf32>
    %31 = vector.multi_reduction <maximumf>, %25, %cst_33 [1] : vector<128x8xf32> to vector<128xf32>
    %32 = vector.shape_cast %31 : vector<128xf32> to vector<128x1xf32>
    %33 = vector.broadcast %32 : vector<128x1xf32> to vector<128x8xf32>
    %34 = arith.subf %25, %33 : vector<128x8xf32>
    %35 = math.exp %34 : vector<128x8xf32>
    %cst_34 = arith.constant dense<0.000000e+00> : vector<128x1xf32>
    %36 = tpu.matmul %35, %26, %cst_34 {dimension_numbers = #tpu.dot_dimension_numbers<[1], [0], [0], [1], [0, 0, 1, 1], [], []>} : vector<128x8xf32>, vector<8x1xf32>, vector<128x1xf32> -> vector<128x1xf32>
    %37 = tpu.reciprocal %36 {approx = true} : vector<128x1xf32> -> vector<128x1xf32>
    %38 = vector.broadcast %37 : vector<128x1xf32> to vector<128x8xf32>
    %39 = arith.mulf %35, %38 : vector<128x8xf32>
    %40 = arith.mulf %0, %39 : vector<128x8xf32>
    %cst_35 = arith.constant dense<0.000000e+00> : vector<128x1xf32>
    %41 = tpu.matmul %40, %26, %cst_35 {dimension_numbers = #tpu.dot_dimension_numbers<[1], [0], [0], [1], [0, 0, 1, 1], [], []>} : vector<128x8xf32>, vector<8x1xf32>, vector<128x1xf32> -> vector<128x1xf32>
    %cst_36 = arith.constant dense<0.000000e+00> : vector<16x1xf32>
    %42 = tpu.matmul %27, %41, %cst_36 {dimension_numbers = #tpu.dot_dimension_numbers<[1], [0], [0], [1], [0, 0, 1, 1], [], []>} : vector<16x128xf32>, vector<128x1xf32>, vector<16x1xf32> -> vector<16x1xf32>
    %43 = vector.shape_cast %42 : vector<16x1xf32> to vector<2x8xf32>
    %cst_37 = arith.constant dense<0xFF800000> : vector<2xf32>
    %44 = vector.multi_reduction <maximumf>, %43, %cst_37 [1] : vector<2x8xf32> to vector<2xf32>
    %45 = vector.shape_cast %44 : vector<2xf32> to vector<2x1xf32>
    %46 = vector.broadcast %45 : vector<2x1xf32> to vector<2x8xf32>
    %47 = arith.subf %43, %46 : vector<2x8xf32>
    %48 = math.exp %47 : vector<2x8xf32>
    %cst_38 = arith.constant dense<0.000000e+00> : vector<2xf32>
    %49 = vector.multi_reduction <add>, %48, %cst_38 [1] : vector<2x8xf32> to vector<2xf32>
    %50 = vector.shape_cast %49 : vector<2xf32> to vector<2x1xf32>
    %51 = vector.broadcast %50 : vector<2x1xf32> to vector<2x8xf32>
    %52 = arith.divf %48, %51 : vector<2x8xf32>
    %cst_39 = arith.constant dense<0.000000e+00> : vector<2xf32>
    %53 = vector.multi_reduction <add>, %52, %cst_39 [1] : vector<2x8xf32> to vector<2xf32>
    %54 = vector.shape_cast %53 : vector<2xf32> to vector<2x1xf32>
    %55 = vector.broadcast %54 : vector<2x1xf32> to vector<2x8xf32>
    %56 = arith.divf %52, %55 : vector<2x8xf32>
    %57 = vector.shape_cast %56 : vector<2x8xf32> to vector<16x1xf32>
    %cst_40 = arith.constant dense<0.000000e+00> : vector<128x1xf32>
    %58 = tpu.matmul %28, %57, %cst_40 {dimension_numbers = #tpu.dot_dimension_numbers<[1], [0], [0], [1], [0, 0, 1, 1], [], []>} : vector<128x16xf32>, vector<16x1xf32>, vector<128x1xf32> -> vector<128x1xf32>
    %59 = vector.broadcast %58 : vector<128x1xf32> to vector<128x8xf32>
    %60 = arith.mulf %0, %59 : vector<128x8xf32>
    %cst_41 = arith.constant dense<0.000000e+00> : vector<16x8xf32>
    %61 = tpu.matmul %29, %60, %cst_41 {dimension_numbers = #tpu.dot_dimension_numbers<[1], [0], [0], [1], [0, 0, 1, 1], [], []>} : vector<16x128xf32>, vector<128x8xf32>, vector<16x8xf32> -> vector<16x8xf32>
    %cst_42 = arith.constant dense<0.000000e+00> : vector<128x8xf32>
    %62 = tpu.matmul %30, %61, %cst_42 {dimension_numbers = #tpu.dot_dimension_numbers<[1], [0], [0], [1], [0, 0, 1, 1], [], []>} : vector<128x16xf32>, vector<16x8xf32>, vector<128x8xf32> -> vector<128x8xf32>
    %63 = arith.mulf %60, %62 : vector<128x8xf32>
    %64 = vector.shape_cast %63 : vector<128x8xf32> to vector<2x8x8x8xf32>
    %cst_43 = arith.constant dense<0xFF800000> : vector<2x8x8xf32>
    %65 = vector.multi_reduction <maximumf>, %64, %cst_43 [1] : vector<2x8x8x8xf32> to vector<2x8x8xf32>
    %66 = vector.shape_cast %65 : vector<2x8x8xf32> to vector<2x1x8x8xf32>
    %67 = vector.broadcast %66 : vector<2x1x8x8xf32> to vector<2x8x8x8xf32>
    %68 = arith.subf %64, %67 : vector<2x8x8x8xf32>
    %69 = math.exp %68 : vector<2x8x8x8xf32>
    %cst_44 = arith.constant dense<0.000000e+00> : vector<2x8x8xf32>
    %70 = vector.multi_reduction <add>, %69, %cst_44 [1] : vector<2x8x8x8xf32> to vector<2x8x8xf32>
    %71 = vector.shape_cast %70 : vector<2x8x8xf32> to vector<2x1x8x8xf32>
    %72 = vector.broadcast %71 : vector<2x1x8x8xf32> to vector<2x8x8x8xf32>
    %73 = arith.divf %69, %72 : vector<2x8x8x8xf32>
    %74 = vector.shape_cast %73 : vector<2x8x8x8xf32> to vector<128x8xf32>
    %75 = arith.mulf %60, %74 : vector<128x8xf32>
    %76 = arith.mulf %75, %74 : vector<128x8xf32>
    %cst_45 = arith.constant dense<0.000000e+00> : vector<128x1xf32>
    %77 = tpu.matmul %76, %26, %cst_45 {dimension_numbers = #tpu.dot_dimension_numbers<[1], [0], [0], [1], [0, 0, 1, 1], [], []>} : vector<128x8xf32>, vector<8x1xf32>, vector<128x1xf32> -> vector<128x1xf32>
    %cst_46 = arith.constant dense<0.000000e+00> : vector<16x1xf32>
    %78 = tpu.matmul %27, %77, %cst_46 {dimension_numbers = #tpu.dot_dimension_numbers<[1], [0], [0], [1], [0, 0, 1, 1], [], []>} : vector<16x128xf32>, vector<128x1xf32>, vector<16x1xf32> -> vector<16x1xf32>
    %79 = vector.shape_cast %78 : vector<16x1xf32> to vector<2x8xf32>
    %c0_47 = arith.constant 0 : index
    %c0_48 = arith.constant 0 : index
    %80 = vector.load %arg13[%c0_47, %c0_48] : memref<2x8xf32, #tpu.memory_space<vmem>>, vector<2x8xf32>
    tpu.vector_store %arg13[%c0_47, %c0_48], %79 {strides = array<i32>} : memref<2x8xf32, #tpu.memory_space<vmem>>, vector<2x8xf32>,
    return
  }
}

</mosaic_0001>

<llo_original>
// kernel: tpu_custom_call.1
$region0: #{tpu_custom_call.1}
  #allocation0 [shape = 'u32[]', space=smem, size = 0x4, offset = 0x4, fixed_abs, tag = 'smem constant byte address 0x4 - core index']
  #allocation1 [shape = 'u32[144,128]{1,0:T(1,128)}', space=vmem, size = 0x12000, scoped, tag = 'internal scratch']
  %s0 = inlined_call_operand.vmem [shape: f32[128,8], index: 0, kind: input, shape index: {}]
  %s1 = inlined_call_operand.vmem [shape: f32[16,16], index: 1, kind: input, shape index: {}]
  %s2 = inlined_call_operand.vmem [shape: bf16[8,128], index: 2, kind: input, shape index: {}]
  %s3 = inlined_call_operand.vmem [shape: f32[16,128], index: 3, kind: input, shape index: {}]
  %s4 = inlined_call_operand.vmem [shape: bf16[128,32], index: 4, kind: input, shape index: {}]
  %s5 = inlined_call_operand.vmem [shape: f32[1,32], index: 5, kind: input, shape index: {}]
  %s6 = inlined_call_operand.vmem [shape: bf16[32,8], index: 6, kind: input, shape index: {}]
  %s7 = inlined_call_operand.vmem [shape: f32[1,8], index: 7, kind: input, shape index: {}]
  %s8 = inlined_call_operand.vmem [shape: f32[8,1], index: 8, kind: input, shape index: {}]
  %s9 = inlined_call_operand.vmem [shape: f32[16,128], index: 9, kind: input, shape index: {}]
  %s10 = inlined_call_operand.vmem [shape: f32[128,16], index: 10, kind: input, shape index: {}]
  %s11 = inlined_call_operand.vmem [shape: f32[16,128], index: 11, kind: input, shape index: {}]
  %s12 = inlined_call_operand.vmem [shape: f32[128,16], index: 12, kind: input, shape index: {}]
  %s13 = inlined_call_operand.hbm [shape: f32[2,8], index: 13, kind: output, shape index: {}]
  %s14 = sld [smem:[#allocation0]]
  $region62: #{tpu_custom_call.1} parent=0
    _
  %s16 = ssub.s32 1, %s14
  %s17 = scalar_select 0, %s16, %s14
  $region1: #{tpu_custom_call.1} parent=0
    #allocation2 [shape = 'u8[1024]{0}', space=vmem, size = 0x400, scoped, tag = 'output window, operand 0, single buffered']
    #allocation3 [shape = 's32[1]{0}', space=sflag, size = 0x4, scoped, tag = 'scoped memory for tpu_custom_call.1']
    %18 = vsyncpa [#allocation3], 0
    // Predicated region
    $region2: #{tpu_custom_call.1} parent=1 // pred_check
      _
    $region3: #{tpu_custom_call.1} parent=1 // pred_check_branch
      %20 = sbr.rel (0) target = $region5
    $region4: #{tpu_custom_call.1} parent=1 // pred_region
      _
    $region5: #{tpu_custom_call.1} parent=1 // pred_fallthru
      _
    // Predicated region
    $region6: #{tpu_custom_call.1} parent=1 // pred_check
      _
    $region7: #{tpu_custom_call.1} parent=1 // pred_check_branch
      %22 = sbr.rel (0) target = $region9
    $region8: #{tpu_custom_call.1} parent=1 // pred_region
      _
    $region9: #{tpu_custom_call.1} parent=1 // pred_fallthru
      _
    // Predicated region
    $region10: #{tpu_custom_call.1} parent=1 // pred_check
      _
    $region11: #{tpu_custom_call.1} parent=1 // pred_check_branch
      %24 = sbr.rel (0) target = $region13
    $region12: #{tpu_custom_call.1} parent=1 // pred_region
      _
    $region13: #{tpu_custom_call.1} parent=1 // pred_fallthru
      _
    // Predicated region
    $region14: #{tpu_custom_call.1} parent=1 // pred_check
      _
    $region15: #{tpu_custom_call.1} parent=1 // pred_check_branch
      %26 = sbr.rel (0) target = $region17
    $region16: #{tpu_custom_call.1} parent=1 // pred_region
      _
    $region17: #{tpu_custom_call.1} parent=1 // pred_fallthru
      _
    // Predicated region
    $region18: #{tpu_custom_call.1} parent=1 // pred_check
      _
    $region19: #{tpu_custom_call.1} parent=1 // pred_check_branch
      %28 = sbr.rel (0) target = $region21
    $region20: #{tpu_custom_call.1} parent=1 // pred_region
      _
    $region21: #{tpu_custom_call.1} parent=1 // pred_fallthru
      _
    // Predicated region
    $region22: #{tpu_custom_call.1} parent=1 // pred_check
      _
    $region23: #{tpu_custom_call.1} parent=1 // pred_check_branch
      %30 = sbr.rel (0) target = $region25
    $region24: #{tpu_custom_call.1} parent=1 // pred_region
      _
    $region25: #{tpu_custom_call.1} parent=1 // pred_fallthru
      _
    // Predicated region
    $region26: #{tpu_custom_call.1} parent=1 // pred_check
      _
    $region27: #{tpu_custom_call.1} parent=1 // pred_check_branch
      %32 = sbr.rel (0) target = $region29
    $region28: #{tpu_custom_call.1} parent=1 // pred_region
      _
    $region29: #{tpu_custom_call.1} parent=1 // pred_fallthru
      _
    // Predicated region
    $region30: #{tpu_custom_call.1} parent=1 // pred_check
      _
    $region31: #{tpu_custom_call.1} parent=1 // pred_check_branch
      %34 = sbr.rel (0) target = $region33
    $region32: #{tpu_custom_call.1} parent=1 // pred_region
      _
    $region33: #{tpu_custom_call.1} parent=1 // pred_fallthru
      _
    // Predicated region
    $region34: #{tpu_custom_call.1} parent=1 // pred_check
      _
    $region35: #{tpu_custom_call.1} parent=1 // pred_check_branch
      %36 = sbr.rel (0) target = $region37
    $region36: #{tpu_custom_call.1} parent=1 // pred_region
      _
    $region37: #{tpu_custom_call.1} parent=1 // pred_fallthru
      _
    // Predicated region
    $region38: #{tpu_custom_call.1} parent=1 // pred_check
      _
    $region39: #{tpu_custom_call.1} parent=1 // pred_check_branch
      %38 = sbr.rel (0) target = $region41
    $region40: #{tpu_custom_call.1} parent=1 // pred_region
      _
    $region41: #{tpu_custom_call.1} parent=1 // pred_fallthru
      _
    // Predicated region
    $region42: #{tpu_custom_call.1} parent=1 // pred_check
      _
    $region43: #{tpu_custom_call.1} parent=1 // pred_check_branch
      %40 = sbr.rel (0) target = $region45
    $region44: #{tpu_custom_call.1} parent=1 // pred_region
      _
    $region45: #{tpu_custom_call.1} parent=1 // pred_fallthru
      _
    // Predicated region
    $region46: #{tpu_custom_call.1} parent=1 // pred_check
      _
    $region47: #{tpu_custom_call.1} parent=1 // pred_check_branch
      %42 = sbr.rel (0) target = $region49
    $region48: #{tpu_custom_call.1} parent=1 // pred_region
      _
    $region49: #{tpu_custom_call.1} parent=1 // pred_fallthru
      _
    // Predicated region
    $region50: #{tpu_custom_call.1} parent=1 // pred_check
      _
    $region51: #{tpu_custom_call.1} parent=1 // pred_check_branch
      %44 = sbr.rel (0) target = $region53
    $region52: #{tpu_custom_call.1} parent=1 // pred_region
      _
    $region53: #{tpu_custom_call.1} parent=1 // pred_fallthru
      _
    %v46 = vld [vmem:[%s0] sm:$0xff]
    %v47 = vld [vmem:[%s0 + $0x8] sm:$0xff]
    %v48 = vld [vmem:[%s0 + $0x10] sm:$0xff]
    %v49 = vld [vmem:[%s0 + $0x18] sm:$0xff]
    %v50 = vld [vmem:[%s0 + $0x20] sm:$0xff]
    %v51 = vld [vmem:[%s0 + $0x28] sm:$0xff]
    %v52 = vld [vmem:[%s0 + $0x30] sm:$0xff]
    %v53 = vld [vmem:[%s0 + $0x38] sm:$0xff]
    %v54 = vld [vmem:[%s0 + $0x40] sm:$0xff]
    %v55 = vld [vmem:[%s0 + $0x48] sm:$0xff]
    %v56 = vld [vmem:[%s0 + $0x50] sm:$0xff]
    %v57 = vld [vmem:[%s0 + $0x58] sm:$0xff]
    %v58 = vld [vmem:[%s0 + $0x60] sm:$0xff]
    %v59 = vld [vmem:[%s0 + $0x68] sm:$0xff]
    %v60 = vld [vmem:[%s0 + $0x70] sm:$0xff]
    %v61 = vld [vmem:[%s0 + $0x78] sm:$0xff]
    %v62 = vpack.c.bf16 %v47, %v46
    %v63 = vpack.c.bf16 %v49, %v48
    %v64 = vpack.c.bf16 %v51, %v50
    %v65 = vpack.c.bf16 %v53, %v52
    %v66 = vpack.c.bf16 %v55, %v54
    %v67 = vpack.c.bf16 %v57, %v56
    %v68 = vpack.c.bf16 %v59, %v58
    %v69 = vpack.c.bf16 %v61, %v60
    %v70 = vld [vmem:[%s2] sm:$0xf]
    %vm71 = vcmask 64512
    %v73 = vsel %vm71, %v62, 0
    %v76 = vsel %vm71, %v63, 0
    %v79 = vsel %vm71, %v64, 0
    %v82 = vsel %vm71, %v65, 0
    %v85 = vsel %vm71, %v66, 0
    %v88 = vsel %vm71, %v67, 0
    %v91 = vsel %vm71, %v68, 0
    %v94 = vsel %vm71, %v69, 0
    %vm96 = vcmask 1043456
    %v98 = vsel %vm96, %v70, 0
    %100 = vmatprep.subr.bf16.mxu0 0
    %101 = vmatpush1.bf16.msra.mxu0 %v98
    %102 = vmatprep.subr.bf16.mxu0 0
    %103 = vmatpush1.bf16.msra.mxu0 0
    %104 = vmatprep.subr.bf16.mxu0 0
    %105 = vmatpush1.bf16.msra.mxu0 0
    %106 = vmatprep.subr.bf16.mxu0 0
    %107 = vmatpush1.bf16.msra.mxu0 0
    %108 = vmatprep.subr.bf16.mxu0 0
    %109 = vmatpush1.bf16.msra.mxu0 0
    %110 = vmatprep.subr.bf16.mxu0 0
    %111 = vmatpush1.bf16.msra.mxu0 0
    %112 = vmatprep.subr.bf16.mxu0 0
    %113 = vmatpush1.bf16.msra.mxu0 0
    %114 = vmatprep.subr.bf16.mxu0 0
    %115 = vmatpush1.bf16.msra.mxu0 0
    %116 = vmatprep.subr.bf16.mxu0 0
    %117 = vmatpush1.bf16.msra.mxu0 0
    %118 = vmatprep.subr.bf16.mxu0 0
    %119 = vmatpush1.bf16.msra.mxu0 0
    %120 = vmatprep.subr.bf16.mxu0 0
    %121 = vmatpush1.bf16.msra.mxu0 0
    %122 = vmatprep.subr.bf16.mxu0 0
    %123 = vmatpush1.bf16.msra.mxu0 0
    %124 = vmatprep.subr.bf16.mxu0 0
    %125 = vmatpush1.bf16.msra.mxu0 0
    %126 = vmatprep.subr.bf16.mxu0 0
    %127 = vmatpush1.bf16.msra.mxu0 0
    %128 = vmatprep.subr.bf16.mxu0 0
    %129 = vmatpush1.bf16.msra.mxu0 0
    %130 = vmatprep.subr.bf16.mxu0 0
    %131 = vmatpush1.bf16.msra.mxu0 0
    %132 = vmatprep.mubr.bf16.mxu0 0
    %133 = vmatmul.mubr.bf16.gmra.mrb[0].mxu0 %v73
    %v134 = vpop.f32.mrb[0].mxu0
    %v135 = vadd.f32 0.0, %v134
    %v136 = vpop.f32.mrb[0].mxu0
    %v137 = vpop.f32.mrb[0].mxu0
    %v138 = vadd.f32 0.0, %v137
    %v139 = vpop.f32.mrb[0].mxu0
    %140 = vmatprep.mubr.bf16.mxu0 0
    %141 = vmatmul.mubr.bf16.gmra.mrb[0].mxu0 %v76
    %v142 = vpop.f32.mrb[0].mxu0
    %v143 = vadd.f32 0.0, %v142
    %v144 = vpop.f32.mrb[0].mxu0
    %v145 = vpop.f32.mrb[0].mxu0
    %v146 = vadd.f32 0.0, %v145
    %v147 = vpop.f32.mrb[0].mxu0
    %148 = vmatprep.mubr.bf16.mxu0 0
    %149 = vmatmul.mubr.bf16.gmra.mrb[0].mxu0 %v79
    %v150 = vpop.f32.mrb[0].mxu0
    %v151 = vadd.f32 0.0, %v150
    %v152 = vpop.f32.mrb[0].mxu0
    %v153 = vpop.f32.mrb[0].mxu0
    %v154 = vadd.f32 0.0, %v153
    %v155 = vpop.f32.mrb[0].mxu0
    %156 = vmatprep.mubr.bf16.mxu0 0
    %157 = vmatmul.mubr.bf16.gmra.mrb[0].mxu0 %v82
    %v158 = vpop.f32.mrb[0].mxu0
    %v159 = vadd.f32 0.0, %v158
    %v160 = vpop.f32.mrb[0].mxu0
    %v161 = vpop.f32.mrb[0].mxu0
    %v162 = vadd.f32 0.0, %v161
    %v163 = vpop.f32.mrb[0].mxu0
    %164 = vmatprep.mubr.bf16.mxu0 0
    %165 = vmatmul.mubr.bf16.gmra.mrb[0].mxu0 %v85
    %v166 = vpop.f32.mrb[0].mxu0
    %v167 = vadd.f32 0.0, %v166
    %v168 = vpop.f32.mrb[0].mxu0
    %v169 = vpop.f32.mrb[0].mxu0
    %v170 = vadd.f32 0.0, %v169
    %v171 = vpop.f32.mrb[0].mxu0
    %172 = vmatprep.mubr.bf16.mxu0 0
    %173 = vmatmul.mubr.bf16.gmra.mrb[0].mxu0 %v88
    %v174 = vpop.f32.mrb[0].mxu0
    %v175 = vadd.f32 0.0, %v174
    %v176 = vpop.f32.mrb[0].mxu0
    %v177 = vpop.f32.mrb[0].mxu0
    %v178 = vadd.f32 0.0, %v177
    %v179 = vpop.f32.mrb[0].mxu0
    %180 = vmatprep.mubr.bf16.mxu0 0
    %181 = vmatmul.mubr.bf16.gmra.mrb[0].mxu0 %v91
    %v182 = vpop.f32.mrb[0].mxu0
    %v183 = vadd.f32 0.0, %v182
    %v184 = vpop.f32.mrb[0].mxu0
    %v185 = vpop.f32.mrb[0].mxu0
    %v186 = vadd.f32 0.0, %v185
    %v187 = vpop.f32.mrb[0].mxu0
    %188 = vmatprep.mubr.bf16.mxu0 0
    %189 = vmatmul.mubr.bf16.gmra.mrb[0].mxu0 %v94
    %v190 = vpop.f32.mrb[0].mxu0
    %v191 = vadd.f32 0.0, %v190
    %v192 = vpop.f32.mrb[0].mxu0
    %v193 = vpop.f32.mrb[0].mxu0
    %v194 = vadd.f32 0.0, %v193
    %v195 = vpop.f32.mrb[0].mxu0
    %196 = vdwg.mxu0
    %v197 = vld [vmem:[%s1] sm:$0xff]
    %v198 = vld [vmem:[%s1 + $0x8] sm:$0xff]
    %v199 = vld [vmem:[%s3] sm:$0xff]
    %v200 = vld [vmem:[%s3 + $0x8] sm:$0xff]
    %vm201 = vcmask 130048
    %v203 = vsel %vm201, %v197, 0
    %v206 = vsel %vm201, %v198, 0
    %208 = vmatprep.subr.mxu0 0.0
    %209 = vmatpush1.msra.mxu0 %v199
    %210 = vmatprep.subr.mxu0 0.0
    %211 = vmatpush1.msra.mxu0 %v200
    %212 = vmatprep.subr.mxu0 0.0
    %213 = vmatpush1.msra.mxu0 0.0
    %214 = vmatprep.subr.mxu0 0.0
    %215 = vmatpush1.msra.mxu0 0.0
    %216 = vmatprep.subr.mxu0 0.0
    %217 = vmatpush1.msra.mxu0 0.0
    %218 = vmatprep.subr.mxu0 0.0
    %219 = vmatpush1.msra.mxu0 0.0
    %220 = vmatprep.subr.mxu0 0.0
    %221 = vmatpush1.msra.mxu0 0.0
    %222 = vmatprep.subr.mxu0 0.0
    %223 = vmatpush1.msra.mxu0 0.0
    %224 = vmatprep.subr.mxu0 0.0
    %225 = vmatpush1.msra.mxu0 0.0
    %226 = vmatprep.subr.mxu0 0.0
    %227 = vmatpush1.msra.mxu0 0.0
    %228 = vmatprep.subr.mxu0 0.0
    %229 = vmatpush1.msra.mxu0 0.0
    %230 = vmatprep.subr.mxu0 0.0
    %231 = vmatpush1.msra.mxu0 0.0
    %232 = vmatprep.subr.mxu0 0.0
    %233 = vmatpush1.msra.mxu0 0.0
    %234 = vmatprep.subr.mxu0 0.0
    %235 = vmatpush1.msra.mxu0 0.0
    %236 = vmatprep.subr.mxu0 0.0
    %237 = vmatpush1.msra.mxu0 0.0
    %238 = vmatprep.subr.mxu0 0.0
    %239 = vmatpush1.msra.mxu0 0.0
    %240 = vmatprep.subr.mxu0 0.0
    %241 = vmatpush1.msra.mxu0 0.0
    %242 = vmatprep.subr.mxu0 0.0
    %243 = vmatpush1.msra.mxu0 0.0
    %244 = vmatprep.subr.mxu0 0.0
    %245 = vmatpush1.msra.mxu0 0.0
    %246 = vmatprep.subr.mxu0 0.0
    %247 = vmatpush1.msra.mxu0 0.0
    %248 = vmatprep.subr.mxu0 0.0
    %249 = vmatpush1.msra.mxu0 0.0
    %250 = vmatprep.subr.mxu0 0.0
    %251 = vmatpush1.msra.mxu0 0.0
    %252 = vmatprep.subr.mxu0 0.0
    %253 = vmatpush1.msra.mxu0 0.0
    %254 = vmatprep.subr.mxu0 0.0
    %255 = vmatpush1.msra.mxu0 0.0
    %256 = vmatprep.subr.mxu0 0.0
    %257 = vmatpush1.msra.mxu0 0.0
    %258 = vmatprep.subr.mxu0 0.0
    %259 = vmatpush1.msra.mxu0 0.0
    %260 = vmatprep.subr.mxu0 0.0
    %261 = vmatpush1.msra.mxu0 0.0
    %262 = vmatprep.subr.mxu0 0.0
    %263 = vmatpush1.msra.mxu0 0.0
    %264 = vmatprep.subr.mxu0 0.0
    %265 = vmatpush1.msra.mxu0 0.0
    %266 = vmatprep.subr.mxu0 0.0
    %267 = vmatpush1.msra.mxu0 0.0
    %268 = vmatprep.subr.mxu0 0.0
    %269 = vmatpush1.msra.mxu0 0.0
    %270 = vmatprep.subr.mxu0 0.0
    %271 = vmatpush1.msra.mxu0 0.0
    %272 = vmatprep.mubr.f32.mxu0 0.0
    %273 = vmatmul.mubr.f32.gmra.mrb[0].mxu0 %v203
    %v274 = vpop.f32.mrb[0].mxu0
    %v275 = vadd.f32 0.0, %v274
    %v276 = vpop.f32.mrb[0].mxu0
    %277 = vmatprep.mubr.f32.mxu0 0.0
    %278 = vmatmul.mubr.f32.gmra.mrb[0].mxu0 %v206
    %v279 = vpop.f32.mrb[0].mxu0
    %v280 = vadd.f32 0.0, %v279
    %v281 = vpop.f32.mrb[0].mxu0
    %282 = vdwg.mxu0
    %v283 = vld [vmem:[%s12] sm:$0xff]
    %v284 = vld [vmem:[%s12 + $0x8] sm:$0xff]
    %v285 = vld [vmem:[%s12 + $0x10] sm:$0xff]
    %v286 = vld [vmem:[%s12 + $0x18] sm:$0xff]
    %v287 = vld [vmem:[%s12 + $0x20] sm:$0xff]
    %v288 = vld [vmem:[%s12 + $0x28] sm:$0xff]
    %v289 = vld [vmem:[%s12 + $0x30] sm:$0xff]
    %v290 = vld [vmem:[%s12 + $0x38] sm:$0xff]
    %v291 = vld [vmem:[%s12 + $0x40] sm:$0xff]
    %v292 = vld [vmem:[%s12 + $0x48] sm:$0xff]
    %v293 = vld [vmem:[%s12 + $0x50] sm:$0xff]
    %v294 = vld [vmem:[%s12 + $0x58] sm:$0xff]
    %v295 = vld [vmem:[%s12 + $0x60] sm:$0xff]
    %v296 = vld [vmem:[%s12 + $0x68] sm:$0xff]
    %v297 = vld [vmem:[%s12 + $0x70] sm:$0xff]
    %v298 = vld [vmem:[%s12 + $0x78] sm:$0xff]
    %v300 = vsel %vm201, %v283, 0
    %v303 = vsel %vm201, %v284, 0
    %v306 = vsel %vm201, %v285, 0
    %v309 = vsel %vm201, %v286, 0
    %v312 = vsel %vm201, %v287, 0
    %v315 = vsel %vm201, %v288, 0
    %v318 = vsel %vm201, %v289, 0
    %v321 = vsel %vm201, %v290, 0
    %v324 = vsel %vm201, %v291, 0
    %v327 = vsel %vm201, %v292, 0
    %v330 = vsel %vm201, %v293, 0
    %v333 = vsel %vm201, %v294, 0
    %v336 = vsel %vm201, %v295, 0
    %v339 = vsel %vm201, %v296, 0
    %v342 = vsel %vm201, %v297, 0
    %v345 = vsel %vm201, %v298, 0
    %347 = vmatprep.subr.mxu0 0.0
    %348 = vmatpush1.msra.mxu0 %v275
    %349 = vmatprep.subr.mxu0 0.0
    %350 = vmatpush1.msra.mxu0 %v280
    %351 = vmatprep.subr.mxu0 0.0
    %352 = vmatpush1.msra.mxu0 0.0
    %353 = vmatprep.subr.mxu0 0.0
    %354 = vmatpush1.msra.mxu0 0.0
    %355 = vmatprep.subr.mxu0 0.0
    %356 = vmatpush1.msra.mxu0 0.0
    %357 = vmatprep.subr.mxu0 0.0
    %358 = vmatpush1.msra.mxu0 0.0
    %359 = vmatprep.subr.mxu0 0.0
    %360 = vmatpush1.msra.mxu0 0.0
    %361 = vmatprep.subr.mxu0 0.0
    %362 = vmatpush1.msra.mxu0 0.0
    %363 = vmatprep.subr.mxu0 0.0
    %364 = vmatpush1.msra.mxu0 0.0
    %365 = vmatprep.subr.mxu0 0.0
    %366 = vmatpush1.msra.mxu0 0.0
    %367 = vmatprep.subr.mxu0 0.0
    %368 = vmatpush1.msra.mxu0 0.0
    %369 = vmatprep.subr.mxu0 0.0
    %370 = vmatpush1.msra.mxu0 0.0
    %371 = vmatprep.subr.mxu0 0.0
    %372 = vmatpush1.msra.mxu0 0.0
    %373 = vmatprep.subr.mxu0 0.0
    %374 = vmatpush1.msra.mxu0 0.0
    %375 = vmatprep.subr.mxu0 0.0
    %376 = vmatpush1.msra.mxu0 0.0
    %377 = vmatprep.subr.mxu0 0.0
    %378 = vmatpush1.msra.mxu0 0.0
    %379 = vmatprep.subr.mxu0 0.0
    %380 = vmatpush1.msra.mxu0 0.0
    %381 = vmatprep.subr.mxu0 0.0
    %382 = vmatpush1.msra.mxu0 0.0
    %383 = vmatprep.subr.mxu0 0.0
    %384 = vmatpush1.msra.mxu0 0.0
    %385 = vmatprep.subr.mxu0 0.0
    %386 = vmatpush1.msra.mxu0 0.0
    %387 = vmatprep.subr.mxu0 0.0
    %388 = vmatpush1.msra.mxu0 0.0
    %389 = vmatprep.subr.mxu0 0.0
    %390 = vmatpush1.msra.mxu0 0.0
    %391 = vmatprep.subr.mxu0 0.0
    %392 = vmatpush1.msra.mxu0 0.0
    %393 = vmatprep.subr.mxu0 0.0
    %394 = vmatpush1.msra.mxu0 0.0
    %395 = vmatprep.subr.mxu0 0.0
    %396 = vmatpush1.msra.mxu0 0.0
    %397 = vmatprep.subr.mxu0 0.0
    %398 = vmatpush1.msra.mxu0 0.0
    %399 = vmatprep.subr.mxu0 0.0
    %400 = vmatpush1.msra.mxu0 0.0
    %401 = vmatprep.subr.mxu0 0.0
    %402 = vmatpush1.msra.mxu0 0.0
    %403 = vmatprep.subr.mxu0 0.0
    %404 = vmatpush1.msra.mxu0 0.0
    %405 = vmatprep.subr.mxu0 0.0
    %406 = vmatpush1.msra.mxu0 0.0
    %407 = vmatprep.subr.mxu0 0.0
    %408 = vmatpush1.msra.mxu0 0.0
    %409 = vmatprep.subr.mxu0 0.0
    %410 = vmatpush1.msra.mxu0 0.0
    %411 = vmatprep.mubr.f32.mxu0 0.0
    %412 = vmatmul.mubr.f32.gmra.mrb[0].mxu0 %v300
    %v413 = vpop.f32.mrb[0].mxu0
    %v414 = vadd.f32 0.0, %v413
    %v415 = vpop.f32.mrb[0].mxu0
    %416 = vmatprep.mubr.f32.mxu0 0.0
    %417 = vmatmul.mubr.f32.gmra.mrb[0].mxu0 %v303
    %v418 = vpop.f32.mrb[0].mxu0
    %v419 = vadd.f32 0.0, %v418
    %v420 = vpop.f32.mrb[0].mxu0
    %421 = vmatprep.mubr.f32.mxu0 0.0
    %422 = vmatmul.mubr.f32.gmra.mrb[0].mxu0 %v306
    %v423 = vpop.f32.mrb[0].mxu0
    %v424 = vadd.f32 0.0, %v423
    %v425 = vpop.f32.mrb[0].mxu0
    %426 = vmatprep.mubr.f32.mxu0 0.0
    %427 = vmatmul.mubr.f32.gmra.mrb[0].mxu0 %v309
    %v428 = vpop.f32.mrb[0].mxu0
    %v429 = vadd.f32 0.0, %v428
    %v430 = vpop.f32.mrb[0].mxu0
    %431 = vmatprep.mubr.f32.mxu0 0.0
    %432 = vmatmul.mubr.f32.gmra.mrb[0].mxu0 %v312
    %v433 = vpop.f32.mrb[0].mxu0
    %v434 = vadd.f32 0.0, %v433
    %v435 = vpop.f32.mrb[0].mxu0
    %436 = vmatprep.mubr.f32.mxu0 0.0
    %437 = vmatmul.mubr.f32.gmra.mrb[0].mxu0 %v315
    %v438 = vpop.f32.mrb[0].mxu0
    %v439 = vadd.f32 0.0, %v438
    %v440 = vpop.f32.mrb[0].mxu0
    %441 = vmatprep.mubr.f32.mxu0 0.0
    %442 = vmatmul.mubr.f32.gmra.mrb[0].mxu0 %v318
    %v443 = vpop.f32.mrb[0].mxu0
    %v444 = vadd.f32 0.0, %v443
    %v445 = vpop.f32.mrb[0].mxu0
    %446 = vmatprep.mubr.f32.mxu0 0.0
    %447 = vmatmul.mubr.f32.gmra.mrb[0].mxu0 %v321
    %v448 = vpop.f32.mrb[0].mxu0
    %v449 = vadd.f32 0.0, %v448
    %v450 = vpop.f32.mrb[0].mxu0
    %451 = vmatprep.mubr.f32.mxu0 0.0
    %452 = vmatmul.mubr.f32.gmra.mrb[0].mxu0 %v324
    %v453 = vpop.f32.mrb[0].mxu0
    %v454 = vadd.f32 0.0, %v453
    %v455 = vpop.f32.mrb[0].mxu0
    %456 = vmatprep.mubr.f32.mxu0 0.0
    %457 = vmatmul.mubr.f32.gmra.mrb[0].mxu0 %v327
    %v458 = vpop.f32.mrb[0].mxu0
    %v459 = vadd.f32 0.0, %v458
    %v460 = vpop.f32.mrb[0].mxu0
    %461 = vmatprep.mubr.f32.mxu0 0.0
    %462 = vmatmul.mubr.f32.gmra.mrb[0].mxu0 %v330
    %v463 = vpop.f32.mrb[0].mxu0
    %v464 = vadd.f32 0.0, %v463
    %v465 = vpop.f32.mrb[0].mxu0
    %466 = vmatprep.mubr.f32.mxu0 0.0
    %467 = vmatmul.mubr.f32.gmra.mrb[0].mxu0 %v333
    %v468 = vpop.f32.mrb[0].mxu0
    %v469 = vadd.f32 0.0, %v468
    %v470 = vpop.f32.mrb[0].mxu0
    %471 = vmatprep.mubr.f32.mxu0 0.0
    %472 = vmatmul.mubr.f32.gmra.mrb[0].mxu0 %v336
    %v473 = vpop.f32.mrb[0].mxu0
    %v474 = vadd.f32 0.0, %v473
    %v475 = vpop.f32.mrb[0].mxu0
    %476 = vmatprep.mubr.f32.mxu0 0.0
    %477 = vmatmul.mubr.f32.gmra.mrb[0].mxu0 %v339
    %v478 = vpop.f32.mrb[0].mxu0
    %v479 = vadd.f32 0.0, %v478
    %v480 = vpop.f32.mrb[0].mxu0
    %481 = vmatprep.mubr.f32.mxu0 0.0
    %482 = vmatmul.mubr.f32.gmra.mrb[0].mxu0 %v342
    %v483 = vpop.f32.mrb[0].mxu0
    %v484 = vadd.f32 0.0, %v483
    %v485 = vpop.f32.mrb[0].mxu0
    %486 = vmatprep.mubr.f32.mxu0 0.0
    %487 = vmatmul.mubr.f32.gmra.mrb[0].mxu0 %v345
    %v488 = vpop.f32.mrb[0].mxu0
    %v489 = vadd.f32 0.0, %v488
    %v490 = vpop.f32.mrb[0].mxu0
    %491 = vdwg.mxu0
    %v492 = vmul.f32 %v135, %v414
    %v493 = vmul.f32 %v138, %v419
    %v494 = vmul.f32 %v143, %v424
    %v495 = vmul.f32 %v146, %v429
    %v496 = vmul.f32 %v151, %v434
    %v497 = vmul.f32 %v154, %v439
    %v498 = vmul.f32 %v159, %v444
    %v499 = vmul.f32 %v162, %v449
    %v500 = vmul.f32 %v167, %v454
    %v501 = vmul.f32 %v170, %v459
    %v502 = vmul.f32 %v175, %v464
    %v503 = vmul.f32 %v178, %v469
    %v504 = vmul.f32 %v183, %v474
    %v505 = vmul.f32 %v186, %v479
    %v506 = vmul.f32 %v191, %v484
    %v507 = vmul.f32 %v194, %v489
    %v508 = vpack.c.bf16 %v493, %v492
    %v509 = vpack.c.bf16 %v495, %v494
    %v510 = vpack.c.bf16 %v497, %v496
    %v511 = vpack.c.bf16 %v499, %v498
    %v512 = vpack.c.bf16 %v501, %v500
    %v513 = vpack.c.bf16 %v503, %v502
    %v514 = vpack.c.bf16 %v505, %v504
    %v515 = vpack.c.bf16 %v507, %v506
    %v516 = vld [vmem:[%s4] sm:$0xf]
    %v517 = vld [vmem:[%s4 + $0x4] sm:$0xf]
    %v518 = vld [vmem:[%s4 + $0x8] sm:$0xf]
    %v519 = vld [vmem:[%s4 + $0xc] sm:$0xf]
    %v520 = vld [vmem:[%s4 + $0x10] sm:$0xf]
    %v521 = vld [vmem:[%s4 + $0x14] sm:$0xf]
    %v522 = vld [vmem:[%s4 + $0x18] sm:$0xf]
    %v523 = vld [vmem:[%s4 + $0x1c] sm:$0xf]
    %v524 = vld [vmem:[%s4 + $0x20] sm:$0xf]
    %v525 = vld [vmem:[%s4 + $0x24] sm:$0xf]
    %v526 = vld [vmem:[%s4 + $0x28] sm:$0xf]
    %v527 = vld [vmem:[%s4 + $0x2c] sm:$0xf]
    %v528 = vld [vmem:[%s4 + $0x30] sm:$0xf]
    %v529 = vld [vmem:[%s4 + $0x34] sm:$0xf]
    %v530 = vld [vmem:[%s4 + $0x38] sm:$0xf]
    %v531 = vld [vmem:[%s4 + $0x3c] sm:$0xf]
    %v532 = vld [vmem:[%s5] sm:$0x1]
    %v534 = vlaneseq
    %v535 = vshrl.u32 %v534, 7
    %v536 = vsub.s32 0, %v535
    %v537 = vrot.slane %v532, %v536
    %v555 = vunpack.c.l.b16 %v516
    %v556 = vunpack.c.l.b16 %v517
    %v557 = vunpack.c.l.b16 %v518
    %v558 = vunpack.c.l.b16 %v519
    %v559 = vunpack.c.l.b16 %v520
    %v560 = vunpack.c.l.b16 %v521
    %v561 = vunpack.c.l.b16 %v522
    %v562 = vunpack.c.l.b16 %v523
    %v563 = vunpack.c.l.b16 %v524
    %v564 = vunpack.c.l.b16 %v525
    %v565 = vunpack.c.l.b16 %v526
    %v566 = vunpack.c.l.b16 %v527
    %v567 = vunpack.c.l.b16 %v528
    %v568 = vunpack.c.l.b16 %v529
    %v569 = vunpack.c.l.b16 %v530
    %v570 = vunpack.c.l.b16 %v531
    %v571 = vpack.c.b16 %v556, %v555
    %v572 = vpack.c.b16 %v558, %v557
    %v573 = vpack.c.b16 %v560, %v559
    %v574 = vpack.c.b16 %v562, %v561
    %v575 = vpack.c.b16 %v564, %v563
    %v576 = vpack.c.b16 %v566, %v565
    %v577 = vpack.c.b16 %v568, %v567
    %v578 = vpack.c.b16 %v570, %v569
    %587 = vmatprep.subr.bf16.mxu0 0
    %588 = vmatpush1.bf16.msra.mxu0 %v571
    %589 = vmatprep.subr.bf16.mxu0 0
    %590 = vmatpush1.bf16.msra.mxu0 %v572
    %591 = vmatprep.subr.bf16.mxu0 0
    %592 = vmatpush1.bf16.msra.mxu0 %v573
    %593 = vmatprep.subr.bf16.mxu0 0
    %594 = vmatpush1.bf16.msra.mxu0 %v574
    %595 = vmatprep.subr.bf16.mxu0 0
    %596 = vmatpush1.bf16.msra.mxu0 %v575
    %597 = vmatprep.subr.bf16.mxu0 0
    %598 = vmatpush1.bf16.msra.mxu0 %v576
    %599 = vmatprep.subr.bf16.mxu0 0
    %600 = vmatpush1.bf16.msra.mxu0 %v577
    %601 = vmatprep.subr.bf16.mxu0 0
    %602 = vmatpush1.bf16.msra.mxu0 %v578
    %603 = vmatprep.subr.bf16.mxu0 0
    %604 = vmatpush1.bf16.msra.mxu0 0
    %605 = vmatprep.subr.bf16.mxu0 0
    %606 = vmatpush1.bf16.msra.mxu0 0
    %607 = vmatprep.subr.bf16.mxu0 0
    %608 = vmatpush1.bf16.msra.mxu0 0
    %609 = vmatprep.subr.bf16.mxu0 0
    %610 = vmatpush1.bf16.msra.mxu0 0
    %611 = vmatprep.subr.bf16.mxu0 0
    %612 = vmatpush1.bf16.msra.mxu0 0
    %613 = vmatprep.subr.bf16.mxu0 0
    %614 = vmatpush1.bf16.msra.mxu0 0
    %615 = vmatprep.subr.bf16.mxu0 0
    %616 = vmatpush1.bf16.msra.mxu0 0
    %617 = vmatprep.subr.bf16.mxu0 0
    %618 = vmatpush1.bf16.msra.mxu0 0
    %619 = vmatprep.mubr.bf16.mxu0 0
    %620 = vmatmul.mubr.bf16.gmra.mrb[0].mxu0 %v508
    %v621 = vpop.f32.mrb[0].mxu0
    %v622 = vadd.f32 %v537, %v621
    %v623 = vpop.f32.mrb[0].mxu0
    %v624 = vpop.f32.mrb[0].mxu0
    %v625 = vadd.f32 %v537, %v624
    %v626 = vpop.f32.mrb[0].mxu0
    %627 = vmatprep.mubr.bf16.mxu0 0
    %628 = vmatmul.mubr.bf16.gmra.mrb[0].mxu0 %v509
    %v629 = vpop.f32.mrb[0].mxu0
    %v630 = vadd.f32 %v537, %v629
    %v631 = vpop.f32.mrb[0].mxu0
    %v632 = vpop.f32.mrb[0].mxu0
    %v633 = vadd.f32 %v537, %v632
    %v634 = vpop.f32.mrb[0].mxu0
    %635 = vmatprep.mubr.bf16.mxu0 0
    %636 = vmatmul.mubr.bf16.gmra.mrb[0].mxu0 %v510
    %v637 = vpop.f32.mrb[0].mxu0
    %v638 = vadd.f32 %v537, %v637
    %v639 = vpop.f32.mrb[0].mxu0
    %v640 = vpop.f32.mrb[0].mxu0
    %v641 = vadd.f32 %v537, %v640
    %v642 = vpop.f32.mrb[0].mxu0
    %643 = vmatprep.mubr.bf16.mxu0 0
    %644 = vmatmul.mubr.bf16.gmra.mrb[0].mxu0 %v511
    %v645 = vpop.f32.mrb[0].mxu0
    %v646 = vadd.f32 %v537, %v645
    %v647 = vpop.f32.mrb[0].mxu0
    %v648 = vpop.f32.mrb[0].mxu0
    %v649 = vadd.f32 %v537, %v648
    %v650 = vpop.f32.mrb[0].mxu0
    %651 = vmatprep.mubr.bf16.mxu0 0
    %652 = vmatmul.mubr.bf16.gmra.mrb[0].mxu0 %v512
    %v653 = vpop.f32.mrb[0].mxu0
    %v654 = vadd.f32 %v537, %v653
    %v655 = vpop.f32.mrb[0].mxu0
    %v656 = vpop.f32.mrb[0].mxu0
    %v657 = vadd.f32 %v537, %v656
    %v658 = vpop.f32.mrb[0].mxu0
    %659 = vmatprep.mubr.bf16.mxu0 0
    %660 = vmatmul.mubr.bf16.gmra.mrb[0].mxu0 %v513
    %v661 = vpop.f32.mrb[0].mxu0
    %v662 = vadd.f32 %v537, %v661
    %v663 = vpop.f32.mrb[0].mxu0
    %v664 = vpop.f32.mrb[0].mxu0
    %v665 = vadd.f32 %v537, %v664
    %v666 = vpop.f32.mrb[0].mxu0
    %667 = vmatprep.mubr.bf16.mxu0 0
    %668 = vmatmul.mubr.bf16.gmra.mrb[0].mxu0 %v514
    %v669 = vpop.f32.mrb[0].mxu0
    %v670 = vadd.f32 %v537, %v669
    %v671 = vpop.f32.mrb[0].mxu0
    %v672 = vpop.f32.mrb[0].mxu0
    %v673 = vadd.f32 %v537, %v672
    %v674 = vpop.f32.mrb[0].mxu0
    %675 = vmatprep.mubr.bf16.mxu0 0
    %676 = vmatmul.mubr.bf16.gmra.mrb[0].mxu0 %v515
    %v677 = vpop.f32.mrb[0].mxu0
    %v678 = vadd.f32 %v537, %v677
    %v679 = vpop.f32.mrb[0].mxu0
    %v680 = vpop.f32.mrb[0].mxu0
    %v681 = vadd.f32 %v537, %v680
    %v682 = vpop.f32.mrb[0].mxu0
    %683 = vdwg.mxu0
    %v684 = vmax.f32 %v622, 0.0
    %v685 = vmax.f32 %v625, 0.0
    %v686 = vmax.f32 %v630, 0.0
    %v687 = vmax.f32 %v633, 0.0
    %v688 = vmax.f32 %v638, 0.0
    %v689 = vmax.f32 %v641, 0.0
    %v690 = vmax.f32 %v646, 0.0
    %v691 = vmax.f32 %v649, 0.0
    %v692 = vmax.f32 %v654, 0.0
    %v693 = vmax.f32 %v657, 0.0
    %v694 = vmax.f32 %v662, 0.0
    %v695 = vmax.f32 %v665, 0.0
    %v696 = vmax.f32 %v670, 0.0
    %v697 = vmax.f32 %v673, 0.0
    %v698 = vmax.f32 %v678, 0.0
    %v699 = vmax.f32 %v681, 0.0
    %v700 = vpack.c.bf16 %v685, %v684
    %v701 = vpack.c.bf16 %v687, %v686
    %v702 = vpack.c.bf16 %v689, %v688
    %v703 = vpack.c.bf16 %v691, %v690
    %v704 = vpack.c.bf16 %v693, %v692
    %v705 = vpack.c.bf16 %v695, %v694
    %v706 = vpack.c.bf16 %v697, %v696
    %v707 = vpack.c.bf16 %v699, %v698
    %v708 = vld [vmem:[%s6] sm:$0xf]
    %v709 = vld [vmem:[%s6 + $0x4] sm:$0xf]
    %v710 = vld [vmem:[%s6 + $0x8] sm:$0xf]
    %v711 = vld [vmem:[%s6 + $0xc] sm:$0xf]
    %v712 = vld [vmem:[%s7] sm:$0x1]
    %v714 = vlaneseq
    %v715 = vshrl.u32 %v714, 7
    %v716 = vsub.s32 0, %v715
    %v717 = vrot.slane %v712, %v716
    %v723 = vunpack.c.l.b16 %v708
    %v724 = vunpack.c.l.b16 %v709
    %v725 = vunpack.c.l.b16 %v710
    %v726 = vunpack.c.l.b16 %v711
    %v727 = vpack.c.b16 %v724, %v723
    %v728 = vpack.c.b16 %v726, %v725
    %vm731 = vcmask 261120
    %v733 = vsel %vm731, %v700, 0
    %v736 = vsel %vm731, %v701, 0
    %v739 = vsel %vm731, %v702, 0
    %v742 = vsel %vm731, %v703, 0
    %v745 = vsel %vm731, %v704, 0
    %v748 = vsel %vm731, %v705, 0
    %v751 = vsel %vm731, %v706, 0
    %v754 = vsel %vm731, %v707, 0
    %756 = vmatprep.subr.bf16.mxu0 0
    %757 = vmatpush1.bf16.msra.mxu0 %v727
    %758 = vmatprep.subr.bf16.mxu0 0
    %759 = vmatpush1.bf16.msra.mxu0 %v728
    %760 = vmatprep.subr.bf16.mxu0 0
    %761 = vmatpush1.bf16.msra.mxu0 0
    %762 = vmatprep.subr.bf16.mxu0 0
    %763 = vmatpush1.bf16.msra.mxu0 0
    %764 = vmatprep.subr.bf16.mxu0 0
    %765 = vmatpush1.bf16.msra.mxu0 0
    %766 = vmatprep.subr.bf16.mxu0 0
    %767 = vmatpush1.bf16.msra.mxu0 0
    %768 = vmatprep.subr.bf16.mxu0 0
    %769 = vmatpush1.bf16.msra.mxu0 0
    %770 = vmatprep.subr.bf16.mxu0 0
    %771 = vmatpush1.bf16.msra.mxu0 0
    %772 = vmatprep.subr.bf16.mxu0 0
    %773 = vmatpush1.bf16.msra.mxu0 0
    %774 = vmatprep.subr.bf16.mxu0 0
    %775 = vmatpush1.bf16.msra.mxu0 0
    %776 = vmatprep.subr.bf16.mxu0 0
    %777 = vmatpush1.bf16.msra.mxu0 0
    %778 = vmatprep.subr.bf16.mxu0 0
    %779 = vmatpush1.bf16.msra.mxu0 0
    %780 = vmatprep.subr.bf16.mxu0 0
    %781 = vmatpush1.bf16.msra.mxu0 0
    %782 = vmatprep.subr.bf16.mxu0 0
    %783 = vmatpush1.bf16.msra.mxu0 0
    %784 = vmatprep.subr.bf16.mxu0 0
    %785 = vmatpush1.bf16.msra.mxu0 0
    %786 = vmatprep.subr.bf16.mxu0 0
    %787 = vmatpush1.bf16.msra.mxu0 0
    %788 = vmatprep.mubr.bf16.mxu0 0
    %789 = vmatmul.mubr.bf16.gmra.mrb[0].mxu0 %v733
    %v790 = vpop.f32.mrb[0].mxu0
    %v791 = vadd.f32 %v717, %v790
    %v792 = vpop.f32.mrb[0].mxu0
    %v793 = vpop.f32.mrb[0].mxu0
    %v794 = vadd.f32 %v717, %v793
    %v795 = vpop.f32.mrb[0].mxu0
    %796 = vmatprep.mubr.bf16.mxu0 0
    %797 = vmatmul.mubr.bf16.gmra.mrb[0].mxu0 %v736
    %v798 = vpop.f32.mrb[0].mxu0
    %v799 = vadd.f32 %v717, %v798
    %v800 = vpop.f32.mrb[0].mxu0
    %v801 = vpop.f32.mrb[0].mxu0
    %v802 = vadd.f32 %v717, %v801
    %v803 = vpop.f32.mrb[0].mxu0
    %804 = vmatprep.mubr.bf16.mxu0 0
    %805 = vmatmul.mubr.bf16.gmra.mrb[0].mxu0 %v739
    %v806 = vpop.f32.mrb[0].mxu0
    %v807 = vadd.f32 %v717, %v806
    %v808 = vpop.f32.mrb[0].mxu0
    %v809 = vpop.f32.mrb[0].mxu0
    %v810 = vadd.f32 %v717, %v809
    %v811 = vpop.f32.mrb[0].mxu0
    %812 = vmatprep.mubr.bf16.mxu0 0
    %813 = vmatmul.mubr.bf16.gmra.mrb[0].mxu0 %v742
    %v814 = vpop.f32.mrb[0].mxu0
    %v815 = vadd.f32 %v717, %v814
    %v816 = vpop.f32.mrb[0].mxu0
    %v817 = vpop.f32.mrb[0].mxu0
    %v818 = vadd.f32 %v717, %v817
    %v819 = vpop.f32.mrb[0].mxu0
    %820 = vmatprep.mubr.bf16.mxu0 0
    %821 = vmatmul.mubr.bf16.gmra.mrb[0].mxu0 %v745
    %v822 = vpop.f32.mrb[0].mxu0
    %v823 = vadd.f32 %v717, %v822
    %v824 = vpop.f32.mrb[0].mxu0
    %v825 = vpop.f32.mrb[0].mxu0
    %v826 = vadd.f32 %v717, %v825
    %v827 = vpop.f32.mrb[0].mxu0
    %828 = vmatprep.mubr.bf16.mxu0 0
    %829 = vmatmul.mubr.bf16.gmra.mrb[0].mxu0 %v748
    %v830 = vpop.f32.mrb[0].mxu0
    %v831 = vadd.f32 %v717, %v830
    %v832 = vpop.f32.mrb[0].mxu0
    %v833 = vpop.f32.mrb[0].mxu0
    %v834 = vadd.f32 %v717, %v833
    %v835 = vpop.f32.mrb[0].mxu0
    %836 = vmatprep.mubr.bf16.mxu0 0
    %837 = vmatmul.mubr.bf16.gmra.mrb[0].mxu0 %v751
    %v838 = vpop.f32.mrb[0].mxu0
    %v839 = vadd.f32 %v717, %v838
    %v840 = vpop.f32.mrb[0].mxu0
    %v841 = vpop.f32.mrb[0].mxu0
    %v842 = vadd.f32 %v717, %v841
    %v843 = vpop.f32.mrb[0].mxu0
    %844 = vmatprep.mubr.bf16.mxu0 0
    %845 = vmatmul.mubr.bf16.gmra.mrb[0].mxu0 %v754
    %v846 = vpop.f32.mrb[0].mxu0
    %v847 = vadd.f32 %v717, %v846
    %v848 = vpop.f32.mrb[0].mxu0
    %v849 = vpop.f32.mrb[0].mxu0
    %v850 = vadd.f32 %v717, %v849
    %v851 = vpop.f32.mrb[0].mxu0
    %852 = vdwg.mxu0
    %v853 = vmax.f32 %v791, 0.0
    %v854 = vmax.f32 %v794, 0.0
    %v855 = vmax.f32 %v799, 0.0
    %v856 = vmax.f32 %v802, 0.0
    %v857 = vmax.f32 %v807, 0.0
    %v858 = vmax.f32 %v810, 0.0
    %v859 = vmax.f32 %v815, 0.0
    %v860 = vmax.f32 %v818, 0.0
    %v861 = vmax.f32 %v823, 0.0
    %v862 = vmax.f32 %v826, 0.0
    %v863 = vmax.f32 %v831, 0.0
    %v864 = vmax.f32 %v834, 0.0
    %v865 = vmax.f32 %v839, 0.0
    %v866 = vmax.f32 %v842, 0.0
    %v867 = vmax.f32 %v847, 0.0
    %v868 = vmax.f32 %v850, 0.0
    %v869 = vld [vmem:[%s8] sm:$0xff]
    %v870 = vld [vmem:[%s9] sm:$0xff]
    %v871 = vld [vmem:[%s9 + $0x8] sm:$0xff]
    %v872 = vld [vmem:[%s10] sm:$0xff]
    %v873 = vld [vmem:[%s10 + $0x8] sm:$0xff]
    %v874 = vld [vmem:[%s10 + $0x10] sm:$0xff]
    %v875 = vld [vmem:[%s10 + $0x18] sm:$0xff]
    %v876 = vld [vmem:[%s10 + $0x20] sm:$0xff]
    %v877 = vld [vmem:[%s10 + $0x28] sm:$0xff]
    %v878 = vld [vmem:[%s10 + $0x30] sm:$0xff]
    %v879 = vld [vmem:[%s10 + $0x38] sm:$0xff]
    %v880 = vld [vmem:[%s10 + $0x40] sm:$0xff]
    %v881 = vld [vmem:[%s10 + $0x48] sm:$0xff]
    %v882 = vld [vmem:[%s10 + $0x50] sm:$0xff]
    %v883 = vld [vmem:[%s10 + $0x58] sm:$0xff]
    %v884 = vld [vmem:[%s10 + $0x60] sm:$0xff]
    %v885 = vld [vmem:[%s10 + $0x68] sm:$0xff]
    %v886 = vld [vmem:[%s10 + $0x70] sm:$0xff]
    %v887 = vld [vmem:[%s10 + $0x78] sm:$0xff]
    %v888 = vld [vmem:[%s11] sm:$0xff]
    %v889 = vld [vmem:[%s11 + $0x8] sm:$0xff]
    %v890 = vsel %vm71, %v853, -inf
    %891 = vmax.xlane.f32.xlu0 %v890
    %v892 = vpop.xlane.xlu0 %891
    %v893 = vsel %vm71, %v854, -inf
    %894 = vmax.xlane.f32.xlu0 %v893
    %v895 = vpop.xlane.xlu0 %894
    %v896 = vsel %vm71, %v855, -inf
    %897 = vmax.xlane.f32.xlu0 %v896
    %v898 = vpop.xlane.xlu0 %897
    %v899 = vsel %vm71, %v856, -inf
    %900 = vmax.xlane.f32.xlu0 %v899
    %v901 = vpop.xlane.xlu0 %900
    %v902 = vsel %vm71, %v857, -inf
    %903 = vmax.xlane.f32.xlu0 %v902
    %v904 = vpop.xlane.xlu0 %903
    %v905 = vsel %vm71, %v858, -inf
    %906 = vmax.xlane.f32.xlu0 %v905
    %v907 = vpop.xlane.xlu0 %906
    %v908 = vsel %vm71, %v859, -inf
    %909 = vmax.xlane.f32.xlu0 %v908
    %v910 = vpop.xlane.xlu0 %909
    %v911 = vsel %vm71, %v860, -inf
    %912 = vmax.xlane.f32.xlu0 %v911
    %v913 = vpop.xlane.xlu0 %912
    %v914 = vsel %vm71, %v861, -inf
    %915 = vmax.xlane.f32.xlu0 %v914
    %v916 = vpop.xlane.xlu0 %915
    %v917 = vsel %vm71, %v862, -inf
    %918 = vmax.xlane.f32.xlu0 %v917
    %v919 = vpop.xlane.xlu0 %918
    %v920 = vsel %vm71, %v863, -inf
    %921 = vmax.xlane.f32.xlu0 %v920
    %v922 = vpop.xlane.xlu0 %921
    %v923 = vsel %vm71, %v864, -inf
    %924 = vmax.xlane.f32.xlu0 %v923
    %v925 = vpop.xlane.xlu0 %924
    %v926 = vsel %vm71, %v865, -inf
    %927 = vmax.xlane.f32.xlu0 %v926
    %v928 = vpop.xlane.xlu0 %927
    %v929 = vsel %vm71, %v866, -inf
    %930 = vmax.xlane.f32.xlu0 %v929
    %v931 = vpop.xlane.xlu0 %930
    %v932 = vsel %vm71, %v867, -inf
    %933 = vmax.xlane.f32.xlu0 %v932
    %v934 = vpop.xlane.xlu0 %933
    %v935 = vsel %vm71, %v868, -inf
    %936 = vmax.xlane.f32.xlu0 %v935
    %v937 = vpop.xlane.xlu0 %936
    %v938 = vsub.f32 %v853, %v892
    %v939 = vsub.f32 %v854, %v895
    %v940 = vsub.f32 %v855, %v898
    %v941 = vsub.f32 %v856, %v901
    %v942 = vsub.f32 %v857, %v904
    %v943 = vsub.f32 %v858, %v907
    %v944 = vsub.f32 %v859, %v910
    %v945 = vsub.f32 %v860, %v913
    %v946 = vsub.f32 %v861, %v916
    %v947 = vsub.f32 %v862, %v919
    %v948 = vsub.f32 %v863, %v922
    %v949 = vsub.f32 %v864, %v925
    %v950 = vsub.f32 %v865, %v928
    %v951 = vsub.f32 %v866, %v931
    %v952 = vsub.f32 %v867, %v934
    %v953 = vsub.f32 %v868, %v937
    %v954 = vmul.f32 %v938, 1.442695
    %v955 = vpow.pop %v954
    %v956 = vmul.f32 %v939, 1.442695
    %v957 = vpow.pop %v956
    %v958 = vmul.f32 %v940, 1.442695
    %v959 = vpow.pop %v958
    %v960 = vmul.f32 %v941, 1.442695
    %v961 = vpow.pop %v960
    %v962 = vmul.f32 %v942, 1.442695
    %v963 = vpow.pop %v962
    %v964 = vmul.f32 %v943, 1.442695
    %v965 = vpow.pop %v964
    %v966 = vmul.f32 %v944, 1.442695
    %v967 = vpow.pop %v966
    %v968 = vmul.f32 %v945, 1.442695
    %v969 = vpow.pop %v968
    %v970 = vmul.f32 %v946, 1.442695
    %v971 = vpow.pop %v970
    %v972 = vmul.f32 %v947, 1.442695
    %v973 = vpow.pop %v972
    %v974 = vmul.f32 %v948, 1.442695
    %v975 = vpow.pop %v974
    %v976 = vmul.f32 %v949, 1.442695
    %v977 = vpow.pop %v976
    %v978 = vmul.f32 %v950, 1.442695
    %v979 = vpow.pop %v978
    %v980 = vmul.f32 %v951, 1.442695
    %v981 = vpow.pop %v980
    %v982 = vmul.f32 %v952, 1.442695
    %v983 = vpow.pop %v982
    %v984 = vmul.f32 %v953, 1.442695
    %v985 = vpow.pop %v984
    %v987 = vsel %vm71, %v955, 0
    %v990 = vsel %vm71, %v957, 0
    %v993 = vsel %vm71, %v959, 0
    %v996 = vsel %vm71, %v961, 0
    %v999 = vsel %vm71, %v963, 0
    %v1002 = vsel %vm71, %v965, 0
    %v1005 = vsel %vm71, %v967, 0
    %v1008 = vsel %vm71, %v969, 0
    %v1011 = vsel %vm71, %v971, 0
    %v1014 = vsel %vm71, %v973, 0
    %v1017 = vsel %vm71, %v975, 0
    %v1020 = vsel %vm71, %v977, 0
    %v1023 = vsel %vm71, %v979, 0
    %v1026 = vsel %vm71, %v981, 0
    %v1029 = vsel %vm71, %v983, 0
    %v1032 = vsel %vm71, %v985, 0
    %1034 = vmatprep.subr.mxu0 0.0
    %1035 = vmatpush1.msra.mxu0 %v869
    %1036 = vmatprep.subr.mxu0 0.0
    %1037 = vmatpush1.msra.mxu0 0.0
    %1038 = vmatprep.subr.mxu0 0.0
    %1039 = vmatpush1.msra.mxu0 0.0
    %1040 = vmatprep.subr.mxu0 0.0
    %1041 = vmatpush1.msra.mxu0 0.0
    %1042 = vmatprep.subr.mxu0 0.0
    %1043 = vmatpush1.msra.mxu0 0.0
    %1044 = vmatprep.subr.mxu0 0.0
    %1045 = vmatpush1.msra.mxu0 0.0
    %1046 = vmatprep.subr.mxu0 0.0
    %1047 = vmatpush1.msra.mxu0 0.0
    %1048 = vmatprep.subr.mxu0 0.0
    %1049 = vmatpush1.msra.mxu0 0.0
    %1050 = vmatprep.subr.mxu0 0.0
    %1051 = vmatpush1.msra.mxu0 0.0
    %1052 = vmatprep.subr.mxu0 0.0
    %1053 = vmatpush1.msra.mxu0 0.0
    %1054 = vmatprep.subr.mxu0 0.0
    %1055 = vmatpush1.msra.mxu0 0.0
    %1056 = vmatprep.subr.mxu0 0.0
    %1057 = vmatpush1.msra.mxu0 0.0
    %1058 = vmatprep.subr.mxu0 0.0
    %1059 = vmatpush1.msra.mxu0 0.0
    %1060 = vmatprep.subr.mxu0 0.0
    %1061 = vmatpush1.msra.mxu0 0.0
    %1062 = vmatprep.subr.mxu0 0.0
    %1063 = vmatpush1.msra.mxu0 0.0
    %1064 = vmatprep.subr.mxu0 0.0
    %1065 = vmatpush1.msra.mxu0 0.0
    %1066 = vmatprep.subr.mxu0 0.0
    %1067 = vmatpush1.msra.mxu0 0.0
    %1068 = vmatprep.subr.mxu0 0.0
    %1069 = vmatpush1.msra.mxu0 0.0
    %1070 = vmatprep.subr.mxu0 0.0
    %1071 = vmatpush1.msra.mxu0 0.0
    %1072 = vmatprep.subr.mxu0 0.0
    %1073 = vmatpush1.msra.mxu0 0.0
    %1074 = vmatprep.subr.mxu0 0.0
    %1075 = vmatpush1.msra.mxu0 0.0
    %1076 = vmatprep.subr.mxu0 0.0
    %1077 = vmatpush1.msra.mxu0 0.0
    %1078 = vmatprep.subr.mxu0 0.0
    %1079 = vmatpush1.msra.mxu0 0.0
    %1080 = vmatprep.subr.mxu0 0.0
    %1081 = vmatpush1.msra.mxu0 0.0
    %1082 = vmatprep.subr.mxu0 0.0
    %1083 = vmatpush1.msra.mxu0 0.0
    %1084 = vmatprep.subr.mxu0 0.0
    %1085 = vmatpush1.msra.mxu0 0.0
    %1086 = vmatprep.subr.mxu0 0.0
    %1087 = vmatpush1.msra.mxu0 0.0
    %1088 = vmatprep.subr.mxu0 0.0
    %1089 = vmatpush1.msra.mxu0 0.0
    %1090 = vmatprep.subr.mxu0 0.0
    %1091 = vmatpush1.msra.mxu0 0.0
    %1092 = vmatprep.subr.mxu0 0.0
    %1093 = vmatpush1.msra.mxu0 0.0
    %1094 = vmatprep.subr.mxu0 0.0
    %1095 = vmatpush1.msra.mxu0 0.0
    %1096 = vmatprep.subr.mxu0 0.0
    %1097 = vmatpush1.msra.mxu0 0.0
    %1098 = vmatprep.mubr.f32.mxu0 0.0
    %1099 = vmatmul.mubr.f32.gmra.mrb[0].mxu0 %v987
    %v1100 = vpop.f32.mrb[0].mxu0
    %v1101 = vadd.f32 0.0, %v1100
    %v1102 = vpop.f32.mrb[0].mxu0
    %1103 = vmatprep.mubr.f32.mxu0 0.0
    %1104 = vmatmul.mubr.f32.gmra.mrb[0].mxu0 %v990
    %v1105 = vpop.f32.mrb[0].mxu0
    %v1106 = vadd.f32 0.0, %v1105
    %v1107 = vpop.f32.mrb[0].mxu0
    %1108 = vmatprep.mubr.f32.mxu0 0.0
    %1109 = vmatmul.mubr.f32.gmra.mrb[0].mxu0 %v993
    %v1110 = vpop.f32.mrb[0].mxu0
    %v1111 = vadd.f32 0.0, %v1110
    %v1112 = vpop.f32.mrb[0].mxu0
    %1113 = vmatprep.mubr.f32.mxu0 0.0
    %1114 = vmatmul.mubr.f32.gmra.mrb[0].mxu0 %v996
    %v1115 = vpop.f32.mrb[0].mxu0
    %v1116 = vadd.f32 0.0, %v1115
    %v1117 = vpop.f32.mrb[0].mxu0
    %1118 = vmatprep.mubr.f32.mxu0 0.0
    %1119 = vmatmul.mubr.f32.gmra.mrb[0].mxu0 %v999
    %v1120 = vpop.f32.mrb[0].mxu0
    %v1121 = vadd.f32 0.0, %v1120
    %v1122 = vpop.f32.mrb[0].mxu0
    %1123 = vmatprep.mubr.f32.mxu0 0.0
    %1124 = vmatmul.mubr.f32.gmra.mrb[0].mxu0 %v1002
    %v1125 = vpop.f32.mrb[0].mxu0
    %v1126 = vadd.f32 0.0, %v1125
    %v1127 = vpop.f32.mrb[0].mxu0
    %1128 = vmatprep.mubr.f32.mxu0 0.0
    %1129 = vmatmul.mubr.f32.gmra.mrb[0].mxu0 %v1005
    %v1130 = vpop.f32.mrb[0].mxu0
    %v1131 = vadd.f32 0.0, %v1130
    %v1132 = vpop.f32.mrb[0].mxu0
    %1133 = vmatprep.mubr.f32.mxu0 0.0
    %1134 = vmatmul.mubr.f32.gmra.mrb[0].mxu0 %v1008
    %v1135 = vpop.f32.mrb[0].mxu0
    %v1136 = vadd.f32 0.0, %v1135
    %v1137 = vpop.f32.mrb[0].mxu0
    %1138 = vmatprep.mubr.f32.mxu0 0.0
    %1139 = vmatmul.mubr.f32.gmra.mrb[0].mxu0 %v1011
    %v1140 = vpop.f32.mrb[0].mxu0
    %v1141 = vadd.f32 0.0, %v1140
    %v1142 = vpop.f32.mrb[0].mxu0
    %1143 = vmatprep.mubr.f32.mxu0 0.0
    %1144 = vmatmul.mubr.f32.gmra.mrb[0].mxu0 %v1014
    %v1145 = vpop.f32.mrb[0].mxu0
    %v1146 = vadd.f32 0.0, %v1145
    %v1147 = vpop.f32.mrb[0].mxu0
    %1148 = vmatprep.mubr.f32.mxu0 0.0
    %1149 = vmatmul.mubr.f32.gmra.mrb[0].mxu0 %v1017
    %v1150 = vpop.f32.mrb[0].mxu0
    %v1151 = vadd.f32 0.0, %v1150
    %v1152 = vpop.f32.mrb[0].mxu0
    %1153 = vmatprep.mubr.f32.mxu0 0.0
    %1154 = vmatmul.mubr.f32.gmra.mrb[0].mxu0 %v1020
    %v1155 = vpop.f32.mrb[0].mxu0
    %v1156 = vadd.f32 0.0, %v1155
    %v1157 = vpop.f32.mrb[0].mxu0
    %1158 = vmatprep.mubr.f32.mxu0 0.0
    %1159 = vmatmul.mubr.f32.gmra.mrb[0].mxu0 %v1023
    %v1160 = vpop.f32.mrb[0].mxu0
    %v1161 = vadd.f32 0.0, %v1160
    %v1162 = vpop.f32.mrb[0].mxu0
    %1163 = vmatprep.mubr.f32.mxu0 0.0
    %1164 = vmatmul.mubr.f32.gmra.mrb[0].mxu0 %v1026
    %v1165 = vpop.f32.mrb[0].mxu0
    %v1166 = vadd.f32 0.0, %v1165
    %v1167 = vpop.f32.mrb[0].mxu0
    %1168 = vmatprep.mubr.f32.mxu0 0.0
    %1169 = vmatmul.mubr.f32.gmra.mrb[0].mxu0 %v1029
    %v1170 = vpop.f32.mrb[0].mxu0
    %v1171 = vadd.f32 0.0, %v1170
    %v1172 = vpop.f32.mrb[0].mxu0
    %1173 = vmatprep.mubr.f32.mxu0 0.0
    %1174 = vmatmul.mubr.f32.gmra.mrb[0].mxu0 %v1032
    %v1175 = vpop.f32.mrb[0].mxu0
    %v1176 = vadd.f32 0.0, %v1175
    %v1177 = vpop.f32.mrb[0].mxu0
    %1178 = vdwg.mxu0
    %v1179 = vrcp.pop %v1101
    %v1180 = vrcp.pop %v1106
    %v1181 = vrcp.pop %v1111
    %v1182 = vrcp.pop %v1116
    %v1183 = vrcp.pop %v1121
    %v1184 = vrcp.pop %v1126
    %v1185 = vrcp.pop %v1131
    %v1186 = vrcp.pop %v1136
    %v1187 = vrcp.pop %v1141
    %v1188 = vrcp.pop %v1146
    %v1189 = vrcp.pop %v1151
    %v1190 = vrcp.pop %v1156
    %v1191 = vrcp.pop %v1161
    %v1192 = vrcp.pop %v1166
    %v1193 = vrcp.pop %v1171
    %v1194 = vrcp.pop %v1176
    %1196 = vset.pattern.permute.xlu0 0
    %1197 = vperm.xlu0 %1196, %v1179
    %v1198 = vpop.permute.xlu0 %1197
    %1201 = vset.pattern.permute.xlu0 0
    %1202 = vperm.xlu0 %1201, %v1180
    %v1203 = vpop.permute.xlu0 %1202
    %1206 = vset.pattern.permute.xlu0 0
    %1207 = vperm.xlu0 %1206, %v1181
    %v1208 = vpop.permute.xlu0 %1207
    %1211 = vset.pattern.permute.xlu0 0
    %1212 = vperm.xlu0 %1211, %v1182
    %v1213 = vpop.permute.xlu0 %1212
    %1216 = vset.pattern.permute.xlu0 0
    %1217 = vperm.xlu0 %1216, %v1183
    %v1218 = vpop.permute.xlu0 %1217
    %1221 = vset.pattern.permute.xlu0 0
    %1222 = vperm.xlu0 %1221, %v1184
    %v1223 = vpop.permute.xlu0 %1222
    %1226 = vset.pattern.permute.xlu0 0
    %1227 = vperm.xlu0 %1226, %v1185
    %v1228 = vpop.permute.xlu0 %1227
    %1231 = vset.pattern.permute.xlu0 0
    %1232 = vperm.xlu0 %1231, %v1186
    %v1233 = vpop.permute.xlu0 %1232
    %1236 = vset.pattern.permute.xlu0 0
    %1237 = vperm.xlu0 %1236, %v1187
    %v1238 = vpop.permute.xlu0 %1237
    %1241 = vset.pattern.permute.xlu0 0
    %1242 = vperm.xlu0 %1241, %v1188
    %v1243 = vpop.permute.xlu0 %1242
    %1246 = vset.pattern.permute.xlu0 0
    %1247 = vperm.xlu0 %1246, %v1189
    %v1248 = vpop.permute.xlu0 %1247
    %1251 = vset.pattern.permute.xlu0 0
    %1252 = vperm.xlu0 %1251, %v1190
    %v1253 = vpop.permute.xlu0 %1252
    %1256 = vset.pattern.permute.xlu0 0
    %1257 = vperm.xlu0 %1256, %v1191
    %v1258 = vpop.permute.xlu0 %1257
    %1261 = vset.pattern.permute.xlu0 0
    %1262 = vperm.xlu0 %1261, %v1192
    %v1263 = vpop.permute.xlu0 %1262
    %1266 = vset.pattern.permute.xlu0 0
    %1267 = vperm.xlu0 %1266, %v1193
    %v1268 = vpop.permute.xlu0 %1267
    %1271 = vset.pattern.permute.xlu0 0
    %1272 = vperm.xlu0 %1271, %v1194
    %v1273 = vpop.permute.xlu0 %1272
    %v1275 = vmul.f32 %v955, %v1198
    %v1276 = vmul.f32 %v957, %v1203
    %v1277 = vmul.f32 %v959, %v1208
    %v1278 = vmul.f32 %v961, %v1213
    %v1279 = vmul.f32 %v963, %v1218
    %v1280 = vmul.f32 %v965, %v1223
    %v1281 = vmul.f32 %v967, %v1228
    %v1282 = vmul.f32 %v969, %v1233
    %v1283 = vmul.f32 %v971, %v1238
    %v1284 = vmul.f32 %v973, %v1243
    %v1285 = vmul.f32 %v975, %v1248
    %v1286 = vmul.f32 %v977, %v1253
    %v1287 = vmul.f32 %v979, %v1258
    %v1288 = vmul.f32 %v981, %v1263
    %v1289 = vmul.f32 %v983, %v1268
    %v1290 = vmul.f32 %v985, %v1273
    %v1291 = vmul.f32 %v46, %v1275
    %v1292 = vmul.f32 %v47, %v1276
    %v1293 = vmul.f32 %v48, %v1277
    %v1294 = vmul.f32 %v49, %v1278
    %v1295 = vmul.f32 %v50, %v1279
    %v1296 = vmul.f32 %v51, %v1280
    %v1297 = vmul.f32 %v52, %v1281
    %v1298 = vmul.f32 %v53, %v1282
    %v1299 = vmul.f32 %v54, %v1283
    %v1300 = vmul.f32 %v55, %v1284
    %v1301 = vmul.f32 %v56, %v1285
    %v1302 = vmul.f32 %v57, %v1286
    %v1303 = vmul.f32 %v58, %v1287
    %v1304 = vmul.f32 %v59, %v1288
    %v1305 = vmul.f32 %v60, %v1289
    %v1306 = vmul.f32 %v61, %v1290
    %v1308 = vsel %vm71, %v1291, 0
    %v1311 = vsel %vm71, %v1292, 0
    %v1314 = vsel %vm71, %v1293, 0
    %v1317 = vsel %vm71, %v1294, 0
    %v1320 = vsel %vm71, %v1295, 0
    %v1323 = vsel %vm71, %v1296, 0
    %v1326 = vsel %vm71, %v1297, 0
    %v1329 = vsel %vm71, %v1298, 0
    %v1332 = vsel %vm71, %v1299, 0
    %v1335 = vsel %vm71, %v1300, 0
    %v1338 = vsel %vm71, %v1301, 0
    %v1341 = vsel %vm71, %v1302, 0
    %v1344 = vsel %vm71, %v1303, 0
    %v1347 = vsel %vm71, %v1304, 0
    %v1350 = vsel %vm71, %v1305, 0
    %v1353 = vsel %vm71, %v1306, 0
    %1355 = vmatprep.subr.mxu0 0.0
    %1356 = vmatpush1.msra.mxu0 %v869
    %1357 = vmatprep.subr.mxu0 0.0
    %1358 = vmatpush1.msra.mxu0 0.0
    %1359 = vmatprep.subr.mxu0 0.0
    %1360 = vmatpush1.msra.mxu0 0.0
    %1361 = vmatprep.subr.mxu0 0.0
    %1362 = vmatpush1.msra.mxu0 0.0
    %1363 = vmatprep.subr.mxu0 0.0
    %1364 = vmatpush1.msra.mxu0 0.0
    %1365 = vmatprep.subr.mxu0 0.0
    %1366 = vmatpush1.msra.mxu0 0.0
    %1367 = vmatprep.subr.mxu0 0.0
    %1368 = vmatpush1.msra.mxu0 0.0
    %1369 = vmatprep.subr.mxu0 0.0
    %1370 = vmatpush1.msra.mxu0 0.0
    %1371 = vmatprep.subr.mxu0 0.0
    %1372 = vmatpush1.msra.mxu0 0.0
    %1373 = vmatprep.subr.mxu0 0.0
    %1374 = vmatpush1.msra.mxu0 0.0
    %1375 = vmatprep.subr.mxu0 0.0
    %1376 = vmatpush1.msra.mxu0 0.0
    %1377 = vmatprep.subr.mxu0 0.0
    %1378 = vmatpush1.msra.mxu0 0.0
    %1379 = vmatprep.subr.mxu0 0.0
    %1380 = vmatpush1.msra.mxu0 0.0
    %1381 = vmatprep.subr.mxu0 0.0
    %1382 = vmatpush1.msra.mxu0 0.0
    %1383 = vmatprep.subr.mxu0 0.0
    %1384 = vmatpush1.msra.mxu0 0.0
    %1385 = vmatprep.subr.mxu0 0.0
    %1386 = vmatpush1.msra.mxu0 0.0
    %1387 = vmatprep.subr.mxu0 0.0
    %1388 = vmatpush1.msra.mxu0 0.0
    %1389 = vmatprep.subr.mxu0 0.0
    %1390 = vmatpush1.msra.mxu0 0.0
    %1391 = vmatprep.subr.mxu0 0.0
    %1392 = vmatpush1.msra.mxu0 0.0
    %1393 = vmatprep.subr.mxu0 0.0
    %1394 = vmatpush1.msra.mxu0 0.0
    %1395 = vmatprep.subr.mxu0 0.0
    %1396 = vmatpush1.msra.mxu0 0.0
    %1397 = vmatprep.subr.mxu0 0.0
    %1398 = vmatpush1.msra.mxu0 0.0
    %1399 = vmatprep.subr.mxu0 0.0
    %1400 = vmatpush1.msra.mxu0 0.0
    %1401 = vmatprep.subr.mxu0 0.0
    %1402 = vmatpush1.msra.mxu0 0.0
    %1403 = vmatprep.subr.mxu0 0.0
    %1404 = vmatpush1.msra.mxu0 0.0
    %1405 = vmatprep.subr.mxu0 0.0
    %1406 = vmatpush1.msra.mxu0 0.0
    %1407 = vmatprep.subr.mxu0 0.0
    %1408 = vmatpush1.msra.mxu0 0.0
    %1409 = vmatprep.subr.mxu0 0.0
    %1410 = vmatpush1.msra.mxu0 0.0
    %1411 = vmatprep.subr.mxu0 0.0
    %1412 = vmatpush1.msra.mxu0 0.0
    %1413 = vmatprep.subr.mxu0 0.0
    %1414 = vmatpush1.msra.mxu0 0.0
    %1415 = vmatprep.subr.mxu0 0.0
    %1416 = vmatpush1.msra.mxu0 0.0
    %1417 = vmatprep.subr.mxu0 0.0
    %1418 = vmatpush1.msra.mxu0 0.0
    %1419 = vmatprep.mubr.f32.mxu0 0.0
    %1420 = vmatmul.mubr.f32.gmra.mrb[0].mxu0 %v1308
    %v1421 = vpop.f32.mrb[0].mxu0
    %v1422 = vadd.f32 0.0, %v1421
    %v1423 = vpop.f32.mrb[0].mxu0
    %1424 = vmatprep.mubr.f32.mxu0 0.0
    %1425 = vmatmul.mubr.f32.gmra.mrb[0].mxu0 %v1311
    %v1426 = vpop.f32.mrb[0].mxu0
    %v1427 = vadd.f32 0.0, %v1426
    %v1428 = vpop.f32.mrb[0].mxu0
    %1429 = vmatprep.mubr.f32.mxu0 0.0
    %1430 = vmatmul.mubr.f32.gmra.mrb[0].mxu0 %v1314
    %v1431 = vpop.f32.mrb[0].mxu0
    %v1432 = vadd.f32 0.0, %v1431
    %v1433 = vpop.f32.mrb[0].mxu0
    %1434 = vmatprep.mubr.f32.mxu0 0.0
    %1435 = vmatmul.mubr.f32.gmra.mrb[0].mxu0 %v1317
    %v1436 = vpop.f32.mrb[0].mxu0
    %v1437 = vadd.f32 0.0, %v1436
    %v1438 = vpop.f32.mrb[0].mxu0
    %1439 = vmatprep.mubr.f32.mxu0 0.0
    %1440 = vmatmul.mubr.f32.gmra.mrb[0].mxu0 %v1320
    %v1441 = vpop.f32.mrb[0].mxu0
    %v1442 = vadd.f32 0.0, %v1441
    %v1443 = vpop.f32.mrb[0].mxu0
    %1444 = vmatprep.mubr.f32.mxu0 0.0
    %1445 = vmatmul.mubr.f32.gmra.mrb[0].mxu0 %v1323
    %v1446 = vpop.f32.mrb[0].mxu0
    %v1447 = vadd.f32 0.0, %v1446
    %v1448 = vpop.f32.mrb[0].mxu0
    %1449 = vmatprep.mubr.f32.mxu0 0.0
    %1450 = vmatmul.mubr.f32.gmra.mrb[0].mxu0 %v1326
    %v1451 = vpop.f32.mrb[0].mxu0
    %v1452 = vadd.f32 0.0, %v1451
    %v1453 = vpop.f32.mrb[0].mxu0
    %1454 = vmatprep.mubr.f32.mxu0 0.0
    %1455 = vmatmul.mubr.f32.gmra.mrb[0].mxu0 %v1329
    %v1456 = vpop.f32.mrb[0].mxu0
    %v1457 = vadd.f32 0.0, %v1456
    %v1458 = vpop.f32.mrb[0].mxu0
    %1459 = vmatprep.mubr.f32.mxu0 0.0
    %1460 = vmatmul.mubr.f32.gmra.mrb[0].mxu0 %v1332
    %v1461 = vpop.f32.mrb[0].mxu0
    %v1462 = vadd.f32 0.0, %v1461
    %v1463 = vpop.f32.mrb[0].mxu0
    %1464 = vmatprep.mubr.f32.mxu0 0.0
    %1465 = vmatmul.mubr.f32.gmra.mrb[0].mxu0 %v1335
    %v1466 = vpop.f32.mrb[0].mxu0
    %v1467 = vadd.f32 0.0, %v1466
    %v1468 = vpop.f32.mrb[0].mxu0
    %1469 = vmatprep.mubr.f32.mxu0 0.0
    %1470 = vmatmul.mubr.f32.gmra.mrb[0].mxu0 %v1338
    %v1471 = vpop.f32.mrb[0].mxu0
    %v1472 = vadd.f32 0.0, %v1471
    %v1473 = vpop.f32.mrb[0].mxu0
    %1474 = vmatprep.mubr.f32.mxu0 0.0
    %1475 = vmatmul.mubr.f32.gmra.mrb[0].mxu0 %v1341
    %v1476 = vpop.f32.mrb[0].mxu0
    %v1477 = vadd.f32 0.0, %v1476
    %v1478 = vpop.f32.mrb[0].mxu0
    %1479 = vmatprep.mubr.f32.mxu0 0.0
    %1480 = vmatmul.mubr.f32.gmra.mrb[0].mxu0 %v1344
    %v1481 = vpop.f32.mrb[0].mxu0
    %v1482 = vadd.f32 0.0, %v1481
    %v1483 = vpop.f32.mrb[0].mxu0
    %1484 = vmatprep.mubr.f32.mxu0 0.0
    %1485 = vmatmul.mubr.f32.gmra.mrb[0].mxu0 %v1347
    %v1486 = vpop.f32.mrb[0].mxu0
    %v1487 = vadd.f32 0.0, %v1486
    %v1488 = vpop.f32.mrb[0].mxu0
    %1489 = vmatprep.mubr.f32.mxu0 0.0
    %1490 = vmatmul.mubr.f32.gmra.mrb[0].mxu0 %v1350
    %v1491 = vpop.f32.mrb[0].mxu0
    %v1492 = vadd.f32 0.0, %v1491
    %v1493 = vpop.f32.mrb[0].mxu0
    %1494 = vmatprep.mubr.f32.mxu0 0.0
    %1495 = vmatmul.mubr.f32.gmra.mrb[0].mxu0 %v1353
    %v1496 = vpop.f32.mrb[0].mxu0
    %v1497 = vadd.f32 0.0, %v1496
    %v1498 = vpop.f32.mrb[0].mxu0
    %1499 = vdwg.mxu0
    %1500 = vmatprep.subr.mxu0 0.0
    %1501 = vmatpush1.msra.mxu0 %v1422
    %1502 = vmatprep.subr.mxu0 0.0
    %1503 = vmatpush1.msra.mxu0 %v1427
    %1504 = vmatprep.subr.mxu0 0.0
    %1505 = vmatpush1.msra.mxu0 %v1432
    %1506 = vmatprep.subr.mxu0 0.0
    %1507 = vmatpush1.msra.mxu0 %v1437
    %1508 = vmatprep.subr.mxu0 0.0
    %1509 = vmatpush1.msra.mxu0 %v1442
    %1510 = vmatprep.subr.mxu0 0.0
    %1511 = vmatpush1.msra.mxu0 %v1447
    %1512 = vmatprep.subr.mxu0 0.0
    %1513 = vmatpush1.msra.mxu0 %v1452
    %1514 = vmatprep.subr.mxu0 0.0
    %1515 = vmatpush1.msra.mxu0 %v1457
    %1516 = vmatprep.subr.mxu0 0.0
    %1517 = vmatpush1.msra.mxu0 %v1462
    %1518 = vmatprep.subr.mxu0 0.0
    %1519 = vmatpush1.msra.mxu0 %v1467
    %1520 = vmatprep.subr.mxu0 0.0
    %1521 = vmatpush1.msra.mxu0 %v1472
    %1522 = vmatprep.subr.mxu0 0.0
    %1523 = vmatpush1.msra.mxu0 %v1477
    %1524 = vmatprep.subr.mxu0 0.0
    %1525 = vmatpush1.msra.mxu0 %v1482
    %1526 = vmatprep.subr.mxu0 0.0
    %1527 = vmatpush1.msra.mxu0 %v1487
    %1528 = vmatprep.subr.mxu0 0.0
    %1529 = vmatpush1.msra.mxu0 %v1492
    %1530 = vmatprep.subr.mxu0 0.0
    %1531 = vmatpush1.msra.mxu0 %v1497
    %1532 = vmatprep.subr.mxu0 0.0
    %1533 = vmatpush1.msra.mxu0 0.0
    %1534 = vmatprep.subr.mxu0 0.0
    %1535 = vmatpush1.msra.mxu0 0.0
    %1536 = vmatprep.subr.mxu0 0.0
    %1537 = vmatpush1.msra.mxu0 0.0
    %1538 = vmatprep.subr.mxu0 0.0
    %1539 = vmatpush1.msra.mxu0 0.0
    %1540 = vmatprep.subr.mxu0 0.0
    %1541 = vmatpush1.msra.mxu0 0.0
    %1542 = vmatprep.subr.mxu0 0.0
    %1543 = vmatpush1.msra.mxu0 0.0
    %1544 = vmatprep.subr.mxu0 0.0
    %1545 = vmatpush1.msra.mxu0 0.0
    %1546 = vmatprep.subr.mxu0 0.0
    %1547 = vmatpush1.msra.mxu0 0.0
    %1548 = vmatprep.subr.mxu0 0.0
    %1549 = vmatpush1.msra.mxu0 0.0
    %1550 = vmatprep.subr.mxu0 0.0
    %1551 = vmatpush1.msra.mxu0 0.0
    %1552 = vmatprep.subr.mxu0 0.0
    %1553 = vmatpush1.msra.mxu0 0.0
    %1554 = vmatprep.subr.mxu0 0.0
    %1555 = vmatpush1.msra.mxu0 0.0
    %1556 = vmatprep.subr.mxu0 0.0
    %1557 = vmatpush1.msra.mxu0 0.0
    %1558 = vmatprep.subr.mxu0 0.0
    %1559 = vmatpush1.msra.mxu0 0.0
    %1560 = vmatprep.subr.mxu0 0.0
    %1561 = vmatpush1.msra.mxu0 0.0
    %1562 = vmatprep.subr.mxu0 0.0
    %1563 = vmatpush1.msra.mxu0 0.0
    %1564 = vmatprep.mubr.f32.mxu0 0.0
    %1565 = vmatmul.mubr.f32.gmra.mrb[0].mxu0 %v870
    %v1566 = vpop.f32.mrb[0].mxu0
    %v1567 = vadd.f32 0.0, %v1566
    %v1568 = vpop.f32.mrb[0].mxu0
    %1569 = vmatprep.mubr.f32.mxu0 0.0
    %1570 = vmatmul.mubr.f32.gmra.mrb[0].mxu0 %v871
    %v1571 = vpop.f32.mrb[0].mxu0
    %v1572 = vadd.f32 0.0, %v1571
    %v1573 = vpop.f32.mrb[0].mxu0
    %1574 = vdwg.mxu0
    %1577 = vset.pattern.permute.xlu0 0
    %1578 = vperm.xlu0 %1577, %v1567
    %v1579 = vpop.permute.xlu0 %1578
    %1580 = vset.pattern.permute.xlu0 0
    %1581 = vperm.xlu0 %1580, %v1572
    %v1582 = vpop.permute.xlu0 %1581
    %v1583 = vlaneseq
    %v1584 = vand.u32 %v1583, 127
    %v1585 = vlaneseq
    %v1586 = vshrl.u32 %v1585, 7
    %v1587 = vsub.s32 %v1584, %v1586
    %v1588 = vrot.slane %v1579, %v1587
    %v1589 = vlaneseq
    %v1590 = vshrl.u32 %v1589, 7
    %v1591 = vsub.s32 %v1584, %v1590
    %v1592 = vrot.slane %v1582, %v1591
    %vm1593 = vcmask 1041409
    %v1594 = vsel %vm1593, %v1592, %v1588
    %vm1596 = vcmask 58368
    %v1597 = vsel %vm1596, %v1594, -inf
    %1598 = vmax.xlane.f32.xlu0 %v1597
    %v1599 = vpop.xlane.xlu0 %1598
    %v1601 = vlaneseq
    %v1602 = vshrl.u32 %v1601, 7
    %v1603 = vsub.s32 0, %v1602
    %v1604 = vrot.slane %v1599, %v1603
    %v1605 = vlaneseq
    %v1606 = vshrl.u32 %v1605, 7
    %v1607 = vsub.s32 1, %v1606
    %v1608 = vrot.slane %v1599, %v1607
    %v1611 = vsub.f32 %v1567, %v1604
    %v1612 = vsub.f32 %v1572, %v1608
    %v1613 = vmul.f32 %v1611, 1.442695
    %v1614 = vpow.pop %v1613
    %v1615 = vmul.f32 %v1612, 1.442695
    %v1616 = vpow.pop %v1615
    %1619 = vset.pattern.permute.xlu0 0
    %1620 = vperm.xlu0 %1619, %v1614
    %v1621 = vpop.permute.xlu0 %1620
    %1622 = vset.pattern.permute.xlu0 0
    %1623 = vperm.xlu0 %1622, %v1616
    %v1624 = vpop.permute.xlu0 %1623
    %v1625 = vlaneseq
    %v1626 = vshrl.u32 %v1625, 7
    %v1627 = vsub.s32 %v1584, %v1626
    %v1628 = vrot.slane %v1621, %v1627
    %v1629 = vlaneseq
    %v1630 = vshrl.u32 %v1629, 7
    %v1631 = vsub.s32 %v1584, %v1630
    %v1632 = vrot.slane %v1624, %v1631
    %v1633 = vsel %vm1593, %v1632, %v1628
    %v1635 = vsel %vm1596, %v1633, 0.0
    %1636 = vadd.xlane.f32.xlu0 %v1635
    %v1637 = vpop.xlane.xlu0 %1636
    %v1639 = vlaneseq
    %v1640 = vshrl.u32 %v1639, 7
    %v1641 = vsub.s32 0, %v1640
    %v1642 = vrot.slane %v1637, %v1641
    %v1643 = vlaneseq
    %v1644 = vshrl.u32 %v1643, 7
    %v1645 = vsub.s32 1, %v1644
    %v1646 = vrot.slane %v1637, %v1645
    %v1649 = vrcp.pop %v1642
    %v1650 = vmul.f32 %v1614, %v1649
    %v1651 = vrcp.pop %v1646
    %v1652 = vmul.f32 %v1616, %v1651
    %1655 = vset.pattern.permute.xlu0 0
    %1656 = vperm.xlu0 %1655, %v1650
    %v1657 = vpop.permute.xlu0 %1656
    %1658 = vset.pattern.permute.xlu0 0
    %1659 = vperm.xlu0 %1658, %v1652
    %v1660 = vpop.permute.xlu0 %1659
    %v1661 = vlaneseq
    %v1662 = vshrl.u32 %v1661, 7
    %v1663 = vsub.s32 %v1584, %v1662
    %v1664 = vrot.slane %v1657, %v1663
    %v1665 = vlaneseq
    %v1666 = vshrl.u32 %v1665, 7
    %v1667 = vsub.s32 %v1584, %v1666
    %v1668 = vrot.slane %v1660, %v1667
    %v1669 = vsel %vm1593, %v1668, %v1664
    %v1671 = vsel %vm1596, %v1669, 0.0
    %1672 = vadd.xlane.f32.xlu0 %v1671
    %v1673 = vpop.xlane.xlu0 %1672
    %v1675 = vlaneseq
    %v1676 = vshrl.u32 %v1675, 7
    %v1677 = vsub.s32 0, %v1676
    %v1678 = vrot.slane %v1673, %v1677
    %v1679 = vlaneseq
    %v1680 = vshrl.u32 %v1679, 7
    %v1681 = vsub.s32 1, %v1680
    %v1682 = vrot.slane %v1673, %v1681
    %v1685 = vrcp.pop %v1678
    %v1686 = vmul.f32 %v1650, %v1685
    %v1687 = vrcp.pop %v1682
    %v1688 = vmul.f32 %v1652, %v1687
    %v1690 = vsel %vm201, %v872, 0
    %v1693 = vsel %vm201, %v873, 0
    %v1696 = vsel %vm201, %v874, 0
    %v1699 = vsel %vm201, %v875, 0
    %v1702 = vsel %vm201, %v876, 0
    %v1705 = vsel %vm201, %v877, 0
    %v1708 = vsel %vm201, %v878, 0
    %v1711 = vsel %vm201, %v879, 0
    %v1714 = vsel %vm201, %v880, 0
    %v1717 = vsel %vm201, %v881, 0
    %v1720 = vsel %vm201, %v882, 0
    %v1723 = vsel %vm201, %v883, 0
    %v1726 = vsel %vm201, %v884, 0
    %v1729 = vsel %vm201, %v885, 0
    %v1732 = vsel %vm201, %v886, 0
    %v1735 = vsel %vm201, %v887, 0
    %1737 = vmatprep.subr.mxu0 0.0
    %1738 = vmatpush1.msra.mxu0 %v1686
    %1739 = vmatprep.subr.mxu0 0.0
    %1740 = vmatpush1.msra.mxu0 %v1688
    %1741 = vmatprep.subr.mxu0 0.0
    %1742 = vmatpush1.msra.mxu0 0.0
    %1743 = vmatprep.subr.mxu0 0.0
    %1744 = vmatpush1.msra.mxu0 0.0
    %1745 = vmatprep.subr.mxu0 0.0
    %1746 = vmatpush1.msra.mxu0 0.0
    %1747 = vmatprep.subr.mxu0 0.0
    %1748 = vmatpush1.msra.mxu0 0.0
    %1749 = vmatprep.subr.mxu0 0.0
    %1750 = vmatpush1.msra.mxu0 0.0
    %1751 = vmatprep.subr.mxu0 0.0
    %1752 = vmatpush1.msra.mxu0 0.0
    %1753 = vmatprep.subr.mxu0 0.0
    %1754 = vmatpush1.msra.mxu0 0.0
    %1755 = vmatprep.subr.mxu0 0.0
    %1756 = vmatpush1.msra.mxu0 0.0
    %1757 = vmatprep.subr.mxu0 0.0
    %1758 = vmatpush1.msra.mxu0 0.0
    %1759 = vmatprep.subr.mxu0 0.0
    %1760 = vmatpush1.msra.mxu0 0.0
    %1761 = vmatprep.subr.mxu0 0.0
    %1762 = vmatpush1.msra.mxu0 0.0
    %1763 = vmatprep.subr.mxu0 0.0
    %1764 = vmatpush1.msra.mxu0 0.0
    %1765 = vmatprep.subr.mxu0 0.0
    %1766 = vmatpush1.msra.mxu0 0.0
    %1767 = vmatprep.subr.mxu0 0.0
    %1768 = vmatpush1.msra.mxu0 0.0
    %1769 = vmatprep.subr.mxu0 0.0
    %1770 = vmatpush1.msra.mxu0 0.0
    %1771 = vmatprep.subr.mxu0 0.0
    %1772 = vmatpush1.msra.mxu0 0.0
    %1773 = vmatprep.subr.mxu0 0.0
    %1774 = vmatpush1.msra.mxu0 0.0
    %1775 = vmatprep.subr.mxu0 0.0
    %1776 = vmatpush1.msra.mxu0 0.0
    %1777 = vmatprep.subr.mxu0 0.0
    %1778 = vmatpush1.msra.mxu0 0.0
    %1779 = vmatprep.subr.mxu0 0.0
    %1780 = vmatpush1.msra.mxu0 0.0
    %1781 = vmatprep.subr.mxu0 0.0
    %1782 = vmatpush1.msra.mxu0 0.0
    %1783 = vmatprep.subr.mxu0 0.0
    %1784 = vmatpush1.msra.mxu0 0.0
    %1785 = vmatprep.subr.mxu0 0.0
    %1786 = vmatpush1.msra.mxu0 0.0
    %1787 = vmatprep.subr.mxu0 0.0
    %1788 = vmatpush1.msra.mxu0 0.0
    %1789 = vmatprep.subr.mxu0 0.0
    %1790 = vmatpush1.msra.mxu0 0.0
    %1791 = vmatprep.subr.mxu0 0.0
    %1792 = vmatpush1.msra.mxu0 0.0
    %1793 = vmatprep.subr.mxu0 0.0
    %1794 = vmatpush1.msra.mxu0 0.0
    %1795 = vmatprep.subr.mxu0 0.0
    %1796 = vmatpush1.msra.mxu0 0.0
    %1797 = vmatprep.subr.mxu0 0.0
    %1798 = vmatpush1.msra.mxu0 0.0
    %1799 = vmatprep.subr.mxu0 0.0
    %1800 = vmatpush1.msra.mxu0 0.0
    %1801 = vmatprep.mubr.f32.mxu0 0.0
    %1802 = vmatmul.mubr.f32.gmra.mrb[0].mxu0 %v1690
    %v1803 = vpop.f32.mrb[0].mxu0
    %v1804 = vadd.f32 0.0, %v1803
    %v1805 = vpop.f32.mrb[0].mxu0
    %1806 = vmatprep.mubr.f32.mxu0 0.0
    %1807 = vmatmul.mubr.f32.gmra.mrb[0].mxu0 %v1693
    %v1808 = vpop.f32.mrb[0].mxu0
    %v1809 = vadd.f32 0.0, %v1808
    %v1810 = vpop.f32.mrb[0].mxu0
    %1811 = vmatprep.mubr.f32.mxu0 0.0
    %1812 = vmatmul.mubr.f32.gmra.mrb[0].mxu0 %v1696
    %v1813 = vpop.f32.mrb[0].mxu0
    %v1814 = vadd.f32 0.0, %v1813
    %v1815 = vpop.f32.mrb[0].mxu0
    %1816 = vmatprep.mubr.f32.mxu0 0.0
    %1817 = vmatmul.mubr.f32.gmra.mrb[0].mxu0 %v1699
    %v1818 = vpop.f32.mrb[0].mxu0
    %v1819 = vadd.f32 0.0, %v1818
    %v1820 = vpop.f32.mrb[0].mxu0
    %1821 = vmatprep.mubr.f32.mxu0 0.0
    %1822 = vmatmul.mubr.f32.gmra.mrb[0].mxu0 %v1702
    %v1823 = vpop.f32.mrb[0].mxu0
    %v1824 = vadd.f32 0.0, %v1823
    %v1825 = vpop.f32.mrb[0].mxu0
    %1826 = vmatprep.mubr.f32.mxu0 0.0
    %1827 = vmatmul.mubr.f32.gmra.mrb[0].mxu0 %v1705
    %v1828 = vpop.f32.mrb[0].mxu0
    %v1829 = vadd.f32 0.0, %v1828
    %v1830 = vpop.f32.mrb[0].mxu0
    %1831 = vmatprep.mubr.f32.mxu0 0.0
    %1832 = vmatmul.mubr.f32.gmra.mrb[0].mxu0 %v1708
    %v1833 = vpop.f32.mrb[0].mxu0
    %v1834 = vadd.f32 0.0, %v1833
    %v1835 = vpop.f32.mrb[0].mxu0
    %1836 = vmatprep.mubr.f32.mxu0 0.0
    %1837 = vmatmul.mubr.f32.gmra.mrb[0].mxu0 %v1711
    %v1838 = vpop.f32.mrb[0].mxu0
    %v1839 = vadd.f32 0.0, %v1838
    %v1840 = vpop.f32.mrb[0].mxu0
    %1841 = vmatprep.mubr.f32.mxu0 0.0
    %1842 = vmatmul.mubr.f32.gmra.mrb[0].mxu0 %v1714
    %v1843 = vpop.f32.mrb[0].mxu0
    %v1844 = vadd.f32 0.0, %v1843
    %v1845 = vpop.f32.mrb[0].mxu0
    %1846 = vmatprep.mubr.f32.mxu0 0.0
    %1847 = vmatmul.mubr.f32.gmra.mrb[0].mxu0 %v1717
    %v1848 = vpop.f32.mrb[0].mxu0
    %v1849 = vadd.f32 0.0, %v1848
    %v1850 = vpop.f32.mrb[0].mxu0
    %1851 = vmatprep.mubr.f32.mxu0 0.0
    %1852 = vmatmul.mubr.f32.gmra.mrb[0].mxu0 %v1720
    %v1853 = vpop.f32.mrb[0].mxu0
    %v1854 = vadd.f32 0.0, %v1853
    %v1855 = vpop.f32.mrb[0].mxu0
    %1856 = vmatprep.mubr.f32.mxu0 0.0
    %1857 = vmatmul.mubr.f32.gmra.mrb[0].mxu0 %v1723
    %v1858 = vpop.f32.mrb[0].mxu0
    %v1859 = vadd.f32 0.0, %v1858
    %v1860 = vpop.f32.mrb[0].mxu0
    %1861 = vmatprep.mubr.f32.mxu0 0.0
    %1862 = vmatmul.mubr.f32.gmra.mrb[0].mxu0 %v1726
    %v1863 = vpop.f32.mrb[0].mxu0
    %v1864 = vadd.f32 0.0, %v1863
    %v1865 = vpop.f32.mrb[0].mxu0
    %1866 = vmatprep.mubr.f32.mxu0 0.0
    %1867 = vmatmul.mubr.f32.gmra.mrb[0].mxu0 %v1729
    %v1868 = vpop.f32.mrb[0].mxu0
    %v1869 = vadd.f32 0.0, %v1868
    %v1870 = vpop.f32.mrb[0].mxu0
    %1871 = vmatprep.mubr.f32.mxu0 0.0
    %1872 = vmatmul.mubr.f32.gmra.mrb[0].mxu0 %v1732
    %v1873 = vpop.f32.mrb[0].mxu0
    %v1874 = vadd.f32 0.0, %v1873
    %v1875 = vpop.f32.mrb[0].mxu0
    %1876 = vmatprep.mubr.f32.mxu0 0.0
    %1877 = vmatmul.mubr.f32.gmra.mrb[0].mxu0 %v1735
    %v1878 = vpop.f32.mrb[0].mxu0
    %v1879 = vadd.f32 0.0, %v1878
    %v1880 = vpop.f32.mrb[0].mxu0
    %1881 = vdwg.mxu0
    %1883 = vset.pattern.permute.xlu0 0
    %1884 = vperm.xlu0 %1883, %v1804
    %v1885 = vpop.permute.xlu0 %1884
    %1888 = vset.pattern.permute.xlu0 0
    %1889 = vperm.xlu0 %1888, %v1809
    %v1890 = vpop.permute.xlu0 %1889
    %1893 = vset.pattern.permute.xlu0 0
    %1894 = vperm.xlu0 %1893, %v1814
    %v1895 = vpop.permute.xlu0 %1894
    %1898 = vset.pattern.permute.xlu0 0
    %1899 = vperm.xlu0 %1898, %v1819
    %v1900 = vpop.permute.xlu0 %1899
    %1903 = vset.pattern.permute.xlu0 0
    %1904 = vperm.xlu0 %1903, %v1824
    %v1905 = vpop.permute.xlu0 %1904
    %1908 = vset.pattern.permute.xlu0 0
    %1909 = vperm.xlu0 %1908, %v1829
    %v1910 = vpop.permute.xlu0 %1909
    %1913 = vset.pattern.permute.xlu0 0
    %1914 = vperm.xlu0 %1913, %v1834
    %v1915 = vpop.permute.xlu0 %1914
    %1918 = vset.pattern.permute.xlu0 0
    %1919 = vperm.xlu0 %1918, %v1839
    %v1920 = vpop.permute.xlu0 %1919
    %1923 = vset.pattern.permute.xlu0 0
    %1924 = vperm.xlu0 %1923, %v1844
    %v1925 = vpop.permute.xlu0 %1924
    %1928 = vset.pattern.permute.xlu0 0
    %1929 = vperm.xlu0 %1928, %v1849
    %v1930 = vpop.permute.xlu0 %1929
    %1933 = vset.pattern.permute.xlu0 0
    %1934 = vperm.xlu0 %1933, %v1854
    %v1935 = vpop.permute.xlu0 %1934
    %1938 = vset.pattern.permute.xlu0 0
    %1939 = vperm.xlu0 %1938, %v1859
    %v1940 = vpop.permute.xlu0 %1939
    %1943 = vset.pattern.permute.xlu0 0
    %1944 = vperm.xlu0 %1943, %v1864
    %v1945 = vpop.permute.xlu0 %1944
    %1948 = vset.pattern.permute.xlu0 0
    %1949 = vperm.xlu0 %1948, %v1869
    %v1950 = vpop.permute.xlu0 %1949
    %1953 = vset.pattern.permute.xlu0 0
    %1954 = vperm.xlu0 %1953, %v1874
    %v1955 = vpop.permute.xlu0 %1954
    %1958 = vset.pattern.permute.xlu0 0
    %1959 = vperm.xlu0 %1958, %v1879
    %v1960 = vpop.permute.xlu0 %1959
    %v1962 = vmul.f32 %v46, %v1885
    %v1963 = vmul.f32 %v47, %v1890
    %v1964 = vmul.f32 %v48, %v1895
    %v1965 = vmul.f32 %v49, %v1900
    %v1966 = vmul.f32 %v50, %v1905
    %v1967 = vmul.f32 %v51, %v1910
    %v1968 = vmul.f32 %v52, %v1915
    %v1969 = vmul.f32 %v53, %v1920
    %v1970 = vmul.f32 %v54, %v1925
    %v1971 = vmul.f32 %v55, %v1930
    %v1972 = vmul.f32 %v56, %v1935
    %v1973 = vmul.f32 %v57, %v1940
    %v1974 = vmul.f32 %v58, %v1945
    %v1975 = vmul.f32 %v59, %v1950
    %v1976 = vmul.f32 %v60, %v1955
    %v1977 = vmul.f32 %v61, %v1960
    %1978 = vmatprep.subr.mxu0 0.0
    %1979 = vmatpush1.msra.mxu0 %v1962
    %1980 = vmatprep.subr.mxu0 0.0
    %1981 = vmatpush1.msra.mxu0 %v1963
    %1982 = vmatprep.subr.mxu0 0.0
    %1983 = vmatpush1.msra.mxu0 %v1964
    %1984 = vmatprep.subr.mxu0 0.0
    %1985 = vmatpush1.msra.mxu0 %v1965
    %1986 = vmatprep.subr.mxu0 0.0
    %1987 = vmatpush1.msra.mxu0 %v1966
    %1988 = vmatprep.subr.mxu0 0.0
    %1989 = vmatpush1.msra.mxu0 %v1967
    %1990 = vmatprep.subr.mxu0 0.0
    %1991 = vmatpush1.msra.mxu0 %v1968
    %1992 = vmatprep.subr.mxu0 0.0
    %1993 = vmatpush1.msra.mxu0 %v1969
    %1994 = vmatprep.subr.mxu0 0.0
    %1995 = vmatpush1.msra.mxu0 %v1970
    %1996 = vmatprep.subr.mxu0 0.0
    %1997 = vmatpush1.msra.mxu0 %v1971
    %1998 = vmatprep.subr.mxu0 0.0
    %1999 = vmatpush1.msra.mxu0 %v1972
    %2000 = vmatprep.subr.mxu0 0.0
    %2001 = vmatpush1.msra.mxu0 %v1973
    %2002 = vmatprep.subr.mxu0 0.0
    %2003 = vmatpush1.msra.mxu0 %v1974
    %2004 = vmatprep.subr.mxu0 0.0
    %2005 = vmatpush1.msra.mxu0 %v1975
    %2006 = vmatprep.subr.mxu0 0.0
    %2007 = vmatpush1.msra.mxu0 %v1976
    %2008 = vmatprep.subr.mxu0 0.0
    %2009 = vmatpush1.msra.mxu0 %v1977
    %2010 = vmatprep.subr.mxu0 0.0
    %2011 = vmatpush1.msra.mxu0 0.0
    %2012 = vmatprep.subr.mxu0 0.0
    %2013 = vmatpush1.msra.mxu0 0.0
    %2014 = vmatprep.subr.mxu0 0.0
    %2015 = vmatpush1.msra.mxu0 0.0
    %2016 = vmatprep.subr.mxu0 0.0
    %2017 = vmatpush1.msra.mxu0 0.0
    %2018 = vmatprep.subr.mxu0 0.0
    %2019 = vmatpush1.msra.mxu0 0.0
    %2020 = vmatprep.subr.mxu0 0.0
    %2021 = vmatpush1.msra.mxu0 0.0
    %2022 = vmatprep.subr.mxu0 0.0
    %2023 = vmatpush1.msra.mxu0 0.0
    %2024 = vmatprep.subr.mxu0 0.0
    %2025 = vmatpush1.msra.mxu0 0.0
    %2026 = vmatprep.subr.mxu0 0.0
    %2027 = vmatpush1.msra.mxu0 0.0
    %2028 = vmatprep.subr.mxu0 0.0
    %2029 = vmatpush1.msra.mxu0 0.0
    %2030 = vmatprep.subr.mxu0 0.0
    %2031 = vmatpush1.msra.mxu0 0.0
    %2032 = vmatprep.subr.mxu0 0.0
    %2033 = vmatpush1.msra.mxu0 0.0
    %2034 = vmatprep.subr.mxu0 0.0
    %2035 = vmatpush1.msra.mxu0 0.0
    %2036 = vmatprep.subr.mxu0 0.0
    %2037 = vmatpush1.msra.mxu0 0.0
    %2038 = vmatprep.subr.mxu0 0.0
    %2039 = vmatpush1.msra.mxu0 0.0
    %2040 = vmatprep.subr.mxu0 0.0
    %2041 = vmatpush1.msra.mxu0 0.0
    %2042 = vmatprep.mubr.f32.mxu0 0.0
    %2043 = vmatmul.mubr.f32.gmra.mrb[0].mxu0 %v888
    %v2044 = vpop.f32.mrb[0].mxu0
    %v2045 = vadd.f32 0.0, %v2044
    %v2046 = vpop.f32.mrb[0].mxu0
    %2047 = vmatprep.mubr.f32.mxu0 0.0
    %2048 = vmatmul.mubr.f32.gmra.mrb[0].mxu0 %v889
    %v2049 = vpop.f32.mrb[0].mxu0
    %v2050 = vadd.f32 0.0, %v2049
    %v2051 = vpop.f32.mrb[0].mxu0
    %2052 = vdwg.mxu0
    %2053 = vmatprep.subr.mxu0 0.0
    %2054 = vmatpush1.msra.mxu0 %v2045
    %2055 = vmatprep.subr.mxu0 0.0
    %2056 = vmatpush1.msra.mxu0 %v2050
    %2057 = vmatprep.subr.mxu0 0.0
    %2058 = vmatpush1.msra.mxu0 0.0
    %2059 = vmatprep.subr.mxu0 0.0
    %2060 = vmatpush1.msra.mxu0 0.0
    %2061 = vmatprep.subr.mxu0 0.0
    %2062 = vmatpush1.msra.mxu0 0.0
    %2063 = vmatprep.subr.mxu0 0.0
    %2064 = vmatpush1.msra.mxu0 0.0
    %2065 = vmatprep.subr.mxu0 0.0
    %2066 = vmatpush1.msra.mxu0 0.0
    %2067 = vmatprep.subr.mxu0 0.0
    %2068 = vmatpush1.msra.mxu0 0.0
    %2069 = vmatprep.subr.mxu0 0.0
    %2070 = vmatpush1.msra.mxu0 0.0
    %2071 = vmatprep.subr.mxu0 0.0
    %2072 = vmatpush1.msra.mxu0 0.0
    %2073 = vmatprep.subr.mxu0 0.0
    %2074 = vmatpush1.msra.mxu0 0.0
    %2075 = vmatprep.subr.mxu0 0.0
    %2076 = vmatpush1.msra.mxu0 0.0
    %2077 = vmatprep.subr.mxu0 0.0
    %2078 = vmatpush1.msra.mxu0 0.0
    %2079 = vmatprep.subr.mxu0 0.0
    %2080 = vmatpush1.msra.mxu0 0.0
    %2081 = vmatprep.subr.mxu0 0.0
    %2082 = vmatpush1.msra.mxu0 0.0
    %2083 = vmatprep.subr.mxu0 0.0
    %2084 = vmatpush1.msra.mxu0 0.0
    %2085 = vmatprep.subr.mxu0 0.0
    %2086 = vmatpush1.msra.mxu0 0.0
    %2087 = vmatprep.subr.mxu0 0.0
    %2088 = vmatpush1.msra.mxu0 0.0
    %2089 = vmatprep.subr.mxu0 0.0
    %2090 = vmatpush1.msra.mxu0 0.0
    %2091 = vmatprep.subr.mxu0 0.0
    %2092 = vmatpush1.msra.mxu0 0.0
    %2093 = vmatprep.subr.mxu0 0.0
    %2094 = vmatpush1.msra.mxu0 0.0
    %2095 = vmatprep.subr.mxu0 0.0
    %2096 = vmatpush1.msra.mxu0 0.0
    %2097 = vmatprep.subr.mxu0 0.0
    %2098 = vmatpush1.msra.mxu0 0.0
    %2099 = vmatprep.subr.mxu0 0.0
    %2100 = vmatpush1.msra.mxu0 0.0
    %2101 = vmatprep.subr.mxu0 0.0
    %2102 = vmatpush1.msra.mxu0 0.0
    %2103 = vmatprep.subr.mxu0 0.0
    %2104 = vmatpush1.msra.mxu0 0.0
    %2105 = vmatprep.subr.mxu0 0.0
    %2106 = vmatpush1.msra.mxu0 0.0
    %2107 = vmatprep.subr.mxu0 0.0
    %2108 = vmatpush1.msra.mxu0 0.0
    %2109 = vmatprep.subr.mxu0 0.0
    %2110 = vmatpush1.msra.mxu0 0.0
    %2111 = vmatprep.subr.mxu0 0.0
    %2112 = vmatpush1.msra.mxu0 0.0
    %2113 = vmatprep.subr.mxu0 0.0
    %2114 = vmatpush1.msra.mxu0 0.0
    %2115 = vmatprep.subr.mxu0 0.0
    %2116 = vmatpush1.msra.mxu0 0.0
    %2117 = vmatprep.mubr.f32.mxu0 0.0
    %2118 = vmatmul.mubr.f32.gmra.mrb[0].mxu0 %v300
    %v2119 = vpop.f32.mrb[0].mxu0
    %v2120 = vadd.f32 0.0, %v2119
    %v2121 = vpop.f32.mrb[0].mxu0
    %2122 = vmatprep.mubr.f32.mxu0 0.0
    %2123 = vmatmul.mubr.f32.gmra.mrb[0].mxu0 %v303
    %v2124 = vpop.f32.mrb[0].mxu0
    %v2125 = vadd.f32 0.0, %v2124
    %v2126 = vpop.f32.mrb[0].mxu0
    %2127 = vmatprep.mubr.f32.mxu0 0.0
    %2128 = vmatmul.mubr.f32.gmra.mrb[0].mxu0 %v306
    %v2129 = vpop.f32.mrb[0].mxu0
    %v2130 = vadd.f32 0.0, %v2129
    %v2131 = vpop.f32.mrb[0].mxu0
    %2132 = vmatprep.mubr.f32.mxu0 0.0
    %2133 = vmatmul.mubr.f32.gmra.mrb[0].mxu0 %v309
    %v2134 = vpop.f32.mrb[0].mxu0
    %v2135 = vadd.f32 0.0, %v2134
    %v2136 = vpop.f32.mrb[0].mxu0
    %2137 = vmatprep.mubr.f32.mxu0 0.0
    %2138 = vmatmul.mubr.f32.gmra.mrb[0].mxu0 %v312
    %v2139 = vpop.f32.mrb[0].mxu0
    %v2140 = vadd.f32 0.0, %v2139
    %v2141 = vpop.f32.mrb[0].mxu0
    %2142 = vmatprep.mubr.f32.mxu0 0.0
    %2143 = vmatmul.mubr.f32.gmra.mrb[0].mxu0 %v315
    %v2144 = vpop.f32.mrb[0].mxu0
    %v2145 = vadd.f32 0.0, %v2144
    %v2146 = vpop.f32.mrb[0].mxu0
    %2147 = vmatprep.mubr.f32.mxu0 0.0
    %2148 = vmatmul.mubr.f32.gmra.mrb[0].mxu0 %v318
    %v2149 = vpop.f32.mrb[0].mxu0
    %v2150 = vadd.f32 0.0, %v2149
    %v2151 = vpop.f32.mrb[0].mxu0
    %2152 = vmatprep.mubr.f32.mxu0 0.0
    %2153 = vmatmul.mubr.f32.gmra.mrb[0].mxu0 %v321
    %v2154 = vpop.f32.mrb[0].mxu0
    %v2155 = vadd.f32 0.0, %v2154
    %v2156 = vpop.f32.mrb[0].mxu0
    %2157 = vmatprep.mubr.f32.mxu0 0.0
    %2158 = vmatmul.mubr.f32.gmra.mrb[0].mxu0 %v324
    %v2159 = vpop.f32.mrb[0].mxu0
    %v2160 = vadd.f32 0.0, %v2159
    %v2161 = vpop.f32.mrb[0].mxu0
    %2162 = vmatprep.mubr.f32.mxu0 0.0
    %2163 = vmatmul.mubr.f32.gmra.mrb[0].mxu0 %v327
    %v2164 = vpop.f32.mrb[0].mxu0
    %v2165 = vadd.f32 0.0, %v2164
    %v2166 = vpop.f32.mrb[0].mxu0
    %2167 = vmatprep.mubr.f32.mxu0 0.0
    %2168 = vmatmul.mubr.f32.gmra.mrb[0].mxu0 %v330
    %v2169 = vpop.f32.mrb[0].mxu0
    %v2170 = vadd.f32 0.0, %v2169
    %v2171 = vpop.f32.mrb[0].mxu0
    %2172 = vmatprep.mubr.f32.mxu0 0.0
    %2173 = vmatmul.mubr.f32.gmra.mrb[0].mxu0 %v333
    %v2174 = vpop.f32.mrb[0].mxu0
    %v2175 = vadd.f32 0.0, %v2174
    %v2176 = vpop.f32.mrb[0].mxu0
    %2177 = vmatprep.mubr.f32.mxu0 0.0
    %2178 = vmatmul.mubr.f32.gmra.mrb[0].mxu0 %v336
    %v2179 = vpop.f32.mrb[0].mxu0
    %v2180 = vadd.f32 0.0, %v2179
    %v2181 = vpop.f32.mrb[0].mxu0
    %2182 = vmatprep.mubr.f32.mxu0 0.0
    %2183 = vmatmul.mubr.f32.gmra.mrb[0].mxu0 %v339
    %v2184 = vpop.f32.mrb[0].mxu0
    %v2185 = vadd.f32 0.0, %v2184
    %v2186 = vpop.f32.mrb[0].mxu0
    %2187 = vmatprep.mubr.f32.mxu0 0.0
    %2188 = vmatmul.mubr.f32.gmra.mrb[0].mxu0 %v342
    %v2189 = vpop.f32.mrb[0].mxu0
    %v2190 = vadd.f32 0.0, %v2189
    %v2191 = vpop.f32.mrb[0].mxu0
    %2192 = vmatprep.mubr.f32.mxu0 0.0
    %2193 = vmatmul.mubr.f32.gmra.mrb[0].mxu0 %v345
    %v2194 = vpop.f32.mrb[0].mxu0
    %v2195 = vadd.f32 0.0, %v2194
    %v2196 = vpop.f32.mrb[0].mxu0
    %2197 = vdwg.mxu0
    %v2198 = vmul.f32 %v1962, %v2120
    %v2199 = vmul.f32 %v1963, %v2125
    %v2200 = vmul.f32 %v1964, %v2130
    %v2201 = vmul.f32 %v1965, %v2135
    %v2202 = vmul.f32 %v1966, %v2140
    %v2203 = vmul.f32 %v1967, %v2145
    %v2204 = vmul.f32 %v1968, %v2150
    %v2205 = vmul.f32 %v1969, %v2155
    %v2206 = vmul.f32 %v1970, %v2160
    %v2207 = vmul.f32 %v1971, %v2165
    %v2208 = vmul.f32 %v1972, %v2170
    %v2209 = vmul.f32 %v1973, %v2175
    %v2210 = vmul.f32 %v1974, %v2180
    %v2211 = vmul.f32 %v1975, %v2185
    %v2212 = vmul.f32 %v1976, %v2190
    %v2213 = vmul.f32 %v1977, %v2195
    %v2214 = vsel %vm71, %v2198, -inf
    %v2215 = vsel %vm71, %v2199, -inf
    %v2216 = vsel %vm71, %v2200, -inf
    %v2217 = vmax.f32 %v2214, %v2216
    %v2218 = vsel %vm71, %v2201, -inf
    %v2219 = vmax.f32 %v2215, %v2218
    %v2220 = vsel %vm71, %v2202, -inf
    %v2221 = vmax.f32 %v2217, %v2220
    %v2222 = vsel %vm71, %v2203, -inf
    %v2223 = vmax.f32 %v2219, %v2222
    %v2224 = vsel %vm71, %v2204, -inf
    %v2225 = vmax.f32 %v2221, %v2224
    %v2226 = vsel %vm71, %v2205, -inf
    %v2227 = vmax.f32 %v2223, %v2226
    %v2228 = vmax.f32 %v2225, %v2227
    %v2229 = vsel %vm71, %v2206, -inf
    %v2230 = vsel %vm71, %v2207, -inf
    %v2231 = vsel %vm71, %v2208, -inf
    %v2232 = vmax.f32 %v2229, %v2231
    %v2233 = vsel %vm71, %v2209, -inf
    %v2234 = vmax.f32 %v2230, %v2233
    %v2235 = vsel %vm71, %v2210, -inf
    %v2236 = vmax.f32 %v2232, %v2235
    %v2237 = vsel %vm71, %v2211, -inf
    %v2238 = vmax.f32 %v2234, %v2237
    %v2239 = vsel %vm71, %v2212, -inf
    %v2240 = vmax.f32 %v2236, %v2239
    %v2241 = vsel %vm71, %v2213, -inf
    %v2242 = vmax.f32 %v2238, %v2241
    %v2243 = vmax.f32 %v2240, %v2242
    %v2244 = vsub.f32 %v2198, %v2228
    %v2245 = vsub.f32 %v2199, %v2228
    %v2246 = vsub.f32 %v2200, %v2228
    %v2247 = vsub.f32 %v2201, %v2228
    %v2248 = vsub.f32 %v2202, %v2228
    %v2249 = vsub.f32 %v2203, %v2228
    %v2250 = vsub.f32 %v2204, %v2228
    %v2251 = vsub.f32 %v2205, %v2228
    %v2252 = vsub.f32 %v2206, %v2243
    %v2253 = vsub.f32 %v2207, %v2243
    %v2254 = vsub.f32 %v2208, %v2243
    %v2255 = vsub.f32 %v2209, %v2243
    %v2256 = vsub.f32 %v2210, %v2243
    %v2257 = vsub.f32 %v2211, %v2243
    %v2258 = vsub.f32 %v2212, %v2243
    %v2259 = vsub.f32 %v2213, %v2243
    %v2260 = vmul.f32 %v2244, 1.442695
    %v2261 = vpow.pop %v2260
    %v2262 = vmul.f32 %v2245, 1.442695
    %v2263 = vpow.pop %v2262
    %v2264 = vmul.f32 %v2246, 1.442695
    %v2265 = vpow.pop %v2264
    %v2266 = vmul.f32 %v2247, 1.442695
    %v2267 = vpow.pop %v2266
    %v2268 = vmul.f32 %v2248, 1.442695
    %v2269 = vpow.pop %v2268
    %v2270 = vmul.f32 %v2249, 1.442695
    %v2271 = vpow.pop %v2270
    %v2272 = vmul.f32 %v2250, 1.442695
    %v2273 = vpow.pop %v2272
    %v2274 = vmul.f32 %v2251, 1.442695
    %v2275 = vpow.pop %v2274
    %v2276 = vmul.f32 %v2252, 1.442695
    %v2277 = vpow.pop %v2276
    %v2278 = vmul.f32 %v2253, 1.442695
    %v2279 = vpow.pop %v2278
    %v2280 = vmul.f32 %v2254, 1.442695
    %v2281 = vpow.pop %v2280
    %v2282 = vmul.f32 %v2255, 1.442695
    %v2283 = vpow.pop %v2282
    %v2284 = vmul.f32 %v2256, 1.442695
    %v2285 = vpow.pop %v2284
    %v2286 = vmul.f32 %v2257, 1.442695
    %v2287 = vpow.pop %v2286
    %v2288 = vmul.f32 %v2258, 1.442695
    %v2289 = vpow.pop %v2288
    %v2290 = vmul.f32 %v2259, 1.442695
    %v2291 = vpow.pop %v2290
    %v2292 = vsel %vm71, %v2261, 0.0
    %v2293 = vsel %vm71, %v2263, 0.0
    %v2294 = vadd.f32 %v2292, %v2293
    %v2295 = vsel %vm71, %v2265, 0.0
    %v2296 = vadd.f32 %v2294, %v2295
    %v2297 = vsel %vm71, %v2267, 0.0
    %v2298 = vadd.f32 %v2296, %v2297
    %v2299 = vsel %vm71, %v2269, 0.0
    %v2300 = vadd.f32 %v2298, %v2299
    %v2301 = vsel %vm71, %v2271, 0.0
    %v2302 = vadd.f32 %v2300, %v2301
    %v2303 = vsel %vm71, %v2273, 0.0
    %v2304 = vadd.f32 %v2302, %v2303
    %v2305 = vsel %vm71, %v2275, 0.0
    %v2306 = vadd.f32 %v2304, %v2305
    %v2307 = vsel %vm71, %v2277, 0.0
    %v2308 = vsel %vm71, %v2279, 0.0
    %v2309 = vadd.f32 %v2307, %v2308
    %v2310 = vsel %vm71, %v2281, 0.0
    %v2311 = vadd.f32 %v2309, %v2310
    %v2312 = vsel %vm71, %v2283, 0.0
    %v2313 = vadd.f32 %v2311, %v2312
    %v2314 = vsel %vm71, %v2285, 0.0
    %v2315 = vadd.f32 %v2313, %v2314
    %v2316 = vsel %vm71, %v2287, 0.0
    %v2317 = vadd.f32 %v2315, %v2316
    %v2318 = vsel %vm71, %v2289, 0.0
    %v2319 = vadd.f32 %v2317, %v2318
    %v2320 = vsel %vm71, %v2291, 0.0
    %v2321 = vadd.f32 %v2319, %v2320
    %v2322 = vrcp.pop %v2306
    %v2323 = vmul.f32 %v2261, %v2322
    %v2324 = vmul.f32 %v2263, %v2322
    %v2325 = vmul.f32 %v2265, %v2322
    %v2326 = vmul.f32 %v2267, %v2322
    %v2327 = vmul.f32 %v2269, %v2322
    %v2328 = vmul.f32 %v2271, %v2322
    %v2329 = vmul.f32 %v2273, %v2322
    %v2330 = vmul.f32 %v2275, %v2322
    %v2331 = vrcp.pop %v2321
    %v2332 = vmul.f32 %v2277, %v2331
    %v2333 = vmul.f32 %v2279, %v2331
    %v2334 = vmul.f32 %v2281, %v2331
    %v2335 = vmul.f32 %v2283, %v2331
    %v2336 = vmul.f32 %v2285, %v2331
    %v2337 = vmul.f32 %v2287, %v2331
    %v2338 = vmul.f32 %v2289, %v2331
    %v2339 = vmul.f32 %v2291, %v2331
    %v2340 = vmul.f32 %v1962, %v2323
    %v2341 = vmul.f32 %v1963, %v2324
    %v2342 = vmul.f32 %v1964, %v2325
    %v2343 = vmul.f32 %v1965, %v2326
    %v2344 = vmul.f32 %v1966, %v2327
    %v2345 = vmul.f32 %v1967, %v2328
    %v2346 = vmul.f32 %v1968, %v2329
    %v2347 = vmul.f32 %v1969, %v2330
    %v2348 = vmul.f32 %v1970, %v2332
    %v2349 = vmul.f32 %v1971, %v2333
    %v2350 = vmul.f32 %v1972, %v2334
    %v2351 = vmul.f32 %v1973, %v2335
    %v2352 = vmul.f32 %v1974, %v2336
    %v2353 = vmul.f32 %v1975, %v2337
    %v2354 = vmul.f32 %v1976, %v2338
    %v2355 = vmul.f32 %v1977, %v2339
    %v2356 = vmul.f32 %v2340, %v2323
    %v2357 = vmul.f32 %v2341, %v2324
    %v2358 = vmul.f32 %v2342, %v2325
    %v2359 = vmul.f32 %v2343, %v2326
    %v2360 = vmul.f32 %v2344, %v2327
    %v2361 = vmul.f32 %v2345, %v2328
    %v2362 = vmul.f32 %v2346, %v2329
    %v2363 = vmul.f32 %v2347, %v2330
    %v2364 = vmul.f32 %v2348, %v2332
    %v2365 = vmul.f32 %v2349, %v2333
    %v2366 = vmul.f32 %v2350, %v2334
    %v2367 = vmul.f32 %v2351, %v2335
    %v2368 = vmul.f32 %v2352, %v2336
    %v2369 = vmul.f32 %v2353, %v2337
    %v2370 = vmul.f32 %v2354, %v2338
    %v2371 = vmul.f32 %v2355, %v2339
    %v2373 = vsel %vm71, %v2356, 0
    %v2376 = vsel %vm71, %v2357, 0
    %v2379 = vsel %vm71, %v2358, 0
    %v2382 = vsel %vm71, %v2359, 0
    %v2385 = vsel %vm71, %v2360, 0
    %v2388 = vsel %vm71, %v2361, 0
    %v2391 = vsel %vm71, %v2362, 0
    %v2394 = vsel %vm71, %v2363, 0
    %v2397 = vsel %vm71, %v2364, 0
    %v2400 = vsel %vm71, %v2365, 0
    %v2403 = vsel %vm71, %v2366, 0
    %v2406 = vsel %vm71, %v2367, 0
    %v2409 = vsel %vm71, %v2368, 0
    %v2412 = vsel %vm71, %v2369, 0
    %v2415 = vsel %vm71, %v2370, 0
    %v2418 = vsel %vm71, %v2371, 0
    %2420 = vmatprep.subr.mxu0 0.0
    %2421 = vmatpush1.msra.mxu0 %v869
    %2422 = vmatprep.subr.mxu0 0.0
    %2423 = vmatpush1.msra.mxu0 0.0
    %2424 = vmatprep.subr.mxu0 0.0
    %2425 = vmatpush1.msra.mxu0 0.0
    %2426 = vmatprep.subr.mxu0 0.0
    %2427 = vmatpush1.msra.mxu0 0.0
    %2428 = vmatprep.subr.mxu0 0.0
    %2429 = vmatpush1.msra.mxu0 0.0
    %2430 = vmatprep.subr.mxu0 0.0
    %2431 = vmatpush1.msra.mxu0 0.0
    %2432 = vmatprep.subr.mxu0 0.0
    %2433 = vmatpush1.msra.mxu0 0.0
    %2434 = vmatprep.subr.mxu0 0.0
    %2435 = vmatpush1.msra.mxu0 0.0
    %2436 = vmatprep.subr.mxu0 0.0
    %2437 = vmatpush1.msra.mxu0 0.0
    %2438 = vmatprep.subr.mxu0 0.0
    %2439 = vmatpush1.msra.mxu0 0.0
    %2440 = vmatprep.subr.mxu0 0.0
    %2441 = vmatpush1.msra.mxu0 0.0
    %2442 = vmatprep.subr.mxu0 0.0
    %2443 = vmatpush1.msra.mxu0 0.0
    %2444 = vmatprep.subr.mxu0 0.0
    %2445 = vmatpush1.msra.mxu0 0.0
    %2446 = vmatprep.subr.mxu0 0.0
    %2447 = vmatpush1.msra.mxu0 0.0
    %2448 = vmatprep.subr.mxu0 0.0
    %2449 = vmatpush1.msra.mxu0 0.0
    %2450 = vmatprep.subr.mxu0 0.0
    %2451 = vmatpush1.msra.mxu0 0.0
    %2452 = vmatprep.subr.mxu0 0.0
    %2453 = vmatpush1.msra.mxu0 0.0
    %2454 = vmatprep.subr.mxu0 0.0
    %2455 = vmatpush1.msra.mxu0 0.0
    %2456 = vmatprep.subr.mxu0 0.0
    %2457 = vmatpush1.msra.mxu0 0.0
    %2458 = vmatprep.subr.mxu0 0.0
    %2459 = vmatpush1.msra.mxu0 0.0
    %2460 = vmatprep.subr.mxu0 0.0
    %2461 = vmatpush1.msra.mxu0 0.0
    %2462 = vmatprep.subr.mxu0 0.0
    %2463 = vmatpush1.msra.mxu0 0.0
    %2464 = vmatprep.subr.mxu0 0.0
    %2465 = vmatpush1.msra.mxu0 0.0
    %2466 = vmatprep.subr.mxu0 0.0
    %2467 = vmatpush1.msra.mxu0 0.0
    %2468 = vmatprep.subr.mxu0 0.0
    %2469 = vmatpush1.msra.mxu0 0.0
    %2470 = vmatprep.subr.mxu0 0.0
    %2471 = vmatpush1.msra.mxu0 0.0
    %2472 = vmatprep.subr.mxu0 0.0
    %2473 = vmatpush1.msra.mxu0 0.0
    %2474 = vmatprep.subr.mxu0 0.0
    %2475 = vmatpush1.msra.mxu0 0.0
    %2476 = vmatprep.subr.mxu0 0.0
    %2477 = vmatpush1.msra.mxu0 0.0
    %2478 = vmatprep.subr.mxu0 0.0
    %2479 = vmatpush1.msra.mxu0 0.0
    %2480 = vmatprep.subr.mxu0 0.0
    %2481 = vmatpush1.msra.mxu0 0.0
    %2482 = vmatprep.subr.mxu0 0.0
    %2483 = vmatpush1.msra.mxu0 0.0
    %2484 = vmatprep.mubr.f32.mxu0 0.0
    %2485 = vmatmul.mubr.f32.gmra.mrb[0].mxu0 %v2373
    %v2486 = vpop.f32.mrb[0].mxu0
    %v2487 = vadd.f32 0.0, %v2486
    %v2488 = vpop.f32.mrb[0].mxu0
    %2489 = vmatprep.mubr.f32.mxu0 0.0
    %2490 = vmatmul.mubr.f32.gmra.mrb[0].mxu0 %v2376
    %v2491 = vpop.f32.mrb[0].mxu0
    %v2492 = vadd.f32 0.0, %v2491
    %v2493 = vpop.f32.mrb[0].mxu0
    %2494 = vmatprep.mubr.f32.mxu0 0.0
    %2495 = vmatmul.mubr.f32.gmra.mrb[0].mxu0 %v2379
    %v2496 = vpop.f32.mrb[0].mxu0
    %v2497 = vadd.f32 0.0, %v2496
    %v2498 = vpop.f32.mrb[0].mxu0
    %2499 = vmatprep.mubr.f32.mxu0 0.0
    %2500 = vmatmul.mubr.f32.gmra.mrb[0].mxu0 %v2382
    %v2501 = vpop.f32.mrb[0].mxu0
    %v2502 = vadd.f32 0.0, %v2501
    %v2503 = vpop.f32.mrb[0].mxu0
    %2504 = vmatprep.mubr.f32.mxu0 0.0
    %2505 = vmatmul.mubr.f32.gmra.mrb[0].mxu0 %v2385
    %v2506 = vpop.f32.mrb[0].mxu0
    %v2507 = vadd.f32 0.0, %v2506
    %v2508 = vpop.f32.mrb[0].mxu0
    %2509 = vmatprep.mubr.f32.mxu0 0.0
    %2510 = vmatmul.mubr.f32.gmra.mrb[0].mxu0 %v2388
    %v2511 = vpop.f32.mrb[0].mxu0
    %v2512 = vadd.f32 0.0, %v2511
    %v2513 = vpop.f32.mrb[0].mxu0
    %2514 = vmatprep.mubr.f32.mxu0 0.0
    %2515 = vmatmul.mubr.f32.gmra.mrb[0].mxu0 %v2391
    %v2516 = vpop.f32.mrb[0].mxu0
    %v2517 = vadd.f32 0.0, %v2516
    %v2518 = vpop.f32.mrb[0].mxu0
    %2519 = vmatprep.mubr.f32.mxu0 0.0
    %2520 = vmatmul.mubr.f32.gmra.mrb[0].mxu0 %v2394
    %v2521 = vpop.f32.mrb[0].mxu0
    %v2522 = vadd.f32 0.0, %v2521
    %v2523 = vpop.f32.mrb[0].mxu0
    %2524 = vmatprep.mubr.f32.mxu0 0.0
    %2525 = vmatmul.mubr.f32.gmra.mrb[0].mxu0 %v2397
    %v2526 = vpop.f32.mrb[0].mxu0
    %v2527 = vadd.f32 0.0, %v2526
    %v2528 = vpop.f32.mrb[0].mxu0
    %2529 = vmatprep.mubr.f32.mxu0 0.0
    %2530 = vmatmul.mubr.f32.gmra.mrb[0].mxu0 %v2400
    %v2531 = vpop.f32.mrb[0].mxu0
    %v2532 = vadd.f32 0.0, %v2531
    %v2533 = vpop.f32.mrb[0].mxu0
    %2534 = vmatprep.mubr.f32.mxu0 0.0
    %2535 = vmatmul.mubr.f32.gmra.mrb[0].mxu0 %v2403
    %v2536 = vpop.f32.mrb[0].mxu0
    %v2537 = vadd.f32 0.0, %v2536
    %v2538 = vpop.f32.mrb[0].mxu0
    %2539 = vmatprep.mubr.f32.mxu0 0.0
    %2540 = vmatmul.mubr.f32.gmra.mrb[0].mxu0 %v2406
    %v2541 = vpop.f32.mrb[0].mxu0
    %v2542 = vadd.f32 0.0, %v2541
    %v2543 = vpop.f32.mrb[0].mxu0
    %2544 = vmatprep.mubr.f32.mxu0 0.0
    %2545 = vmatmul.mubr.f32.gmra.mrb[0].mxu0 %v2409
    %v2546 = vpop.f32.mrb[0].mxu0
    %v2547 = vadd.f32 0.0, %v2546
    %v2548 = vpop.f32.mrb[0].mxu0
    %2549 = vmatprep.mubr.f32.mxu0 0.0
    %2550 = vmatmul.mubr.f32.gmra.mrb[0].mxu0 %v2412
    %v2551 = vpop.f32.mrb[0].mxu0
    %v2552 = vadd.f32 0.0, %v2551
    %v2553 = vpop.f32.mrb[0].mxu0
    %2554 = vmatprep.mubr.f32.mxu0 0.0
    %2555 = vmatmul.mubr.f32.gmra.mrb[0].mxu0 %v2415
    %v2556 = vpop.f32.mrb[0].mxu0
    %v2557 = vadd.f32 0.0, %v2556
    %v2558 = vpop.f32.mrb[0].mxu0
    %2559 = vmatprep.mubr.f32.mxu0 0.0
    %2560 = vmatmul.mubr.f32.gmra.mrb[0].mxu0 %v2418
    %v2561 = vpop.f32.mrb[0].mxu0
    %v2562 = vadd.f32 0.0, %v2561
    %v2563 = vpop.f32.mrb[0].mxu0
    %2564 = vdwg.mxu0
    %2565 = vmatprep.subr.mxu0 0.0
    %2566 = vmatpush1.msra.mxu0 %v2487
    %2567 = vmatprep.subr.mxu0 0.0
    %2568 = vmatpush1.msra.mxu0 %v2492
    %2569 = vmatprep.subr.mxu0 0.0
    %2570 = vmatpush1.msra.mxu0 %v2497
    %2571 = vmatprep.subr.mxu0 0.0
    %2572 = vmatpush1.msra.mxu0 %v2502
    %2573 = vmatprep.subr.mxu0 0.0
    %2574 = vmatpush1.msra.mxu0 %v2507
    %2575 = vmatprep.subr.mxu0 0.0
    %2576 = vmatpush1.msra.mxu0 %v2512
    %2577 = vmatprep.subr.mxu0 0.0
    %2578 = vmatpush1.msra.mxu0 %v2517
    %2579 = vmatprep.subr.mxu0 0.0
    %2580 = vmatpush1.msra.mxu0 %v2522
    %2581 = vmatprep.subr.mxu0 0.0
    %2582 = vmatpush1.msra.mxu0 %v2527
    %2583 = vmatprep.subr.mxu0 0.0
    %2584 = vmatpush1.msra.mxu0 %v2532
    %2585 = vmatprep.subr.mxu0 0.0
    %2586 = vmatpush1.msra.mxu0 %v2537
    %2587 = vmatprep.subr.mxu0 0.0
    %2588 = vmatpush1.msra.mxu0 %v2542
    %2589 = vmatprep.subr.mxu0 0.0
    %2590 = vmatpush1.msra.mxu0 %v2547
    %2591 = vmatprep.subr.mxu0 0.0
    %2592 = vmatpush1.msra.mxu0 %v2552
    %2593 = vmatprep.subr.mxu0 0.0
    %2594 = vmatpush1.msra.mxu0 %v2557
    %2595 = vmatprep.subr.mxu0 0.0
    %2596 = vmatpush1.msra.mxu0 %v2562
    %2597 = vmatprep.subr.mxu0 0.0
    %2598 = vmatpush1.msra.mxu0 0.0
    %2599 = vmatprep.subr.mxu0 0.0
    %2600 = vmatpush1.msra.mxu0 0.0
    %2601 = vmatprep.subr.mxu0 0.0
    %2602 = vmatpush1.msra.mxu0 0.0
    %2603 = vmatprep.subr.mxu0 0.0
    %2604 = vmatpush1.msra.mxu0 0.0
    %2605 = vmatprep.subr.mxu0 0.0
    %2606 = vmatpush1.msra.mxu0 0.0
    %2607 = vmatprep.subr.mxu0 0.0
    %2608 = vmatpush1.msra.mxu0 0.0
    %2609 = vmatprep.subr.mxu0 0.0
    %2610 = vmatpush1.msra.mxu0 0.0
    %2611 = vmatprep.subr.mxu0 0.0
    %2612 = vmatpush1.msra.mxu0 0.0
    %2613 = vmatprep.subr.mxu0 0.0
    %2614 = vmatpush1.msra.mxu0 0.0
    %2615 = vmatprep.subr.mxu0 0.0
    %2616 = vmatpush1.msra.mxu0 0.0
    %2617 = vmatprep.subr.mxu0 0.0
    %2618 = vmatpush1.msra.mxu0 0.0
    %2619 = vmatprep.subr.mxu0 0.0
    %2620 = vmatpush1.msra.mxu0 0.0
    %2621 = vmatprep.subr.mxu0 0.0
    %2622 = vmatpush1.msra.mxu0 0.0
    %2623 = vmatprep.subr.mxu0 0.0
    %2624 = vmatpush1.msra.mxu0 0.0
    %2625 = vmatprep.subr.mxu0 0.0
    %2626 = vmatpush1.msra.mxu0 0.0
    %2627 = vmatprep.subr.mxu0 0.0
    %2628 = vmatpush1.msra.mxu0 0.0
    %2629 = vmatprep.mubr.f32.mxu0 0.0
    %2630 = vmatmul.mubr.f32.gmra.mrb[0].mxu0 %v870
    %v2631 = vpop.f32.mrb[0].mxu0
    %v2632 = vadd.f32 0.0, %v2631
    %v2633 = vpop.f32.mrb[0].mxu0
    %2634 = vmatprep.mubr.f32.mxu0 0.0
    %2635 = vmatmul.mubr.f32.gmra.mrb[0].mxu0 %v871
    %v2636 = vpop.f32.mrb[0].mxu0
    %v2637 = vadd.f32 0.0, %v2636
    %v2638 = vpop.f32.mrb[0].mxu0
    %2639 = vdwg.mxu0
    %2642 = vset.pattern.permute.xlu0 0
    %2643 = vperm.xlu0 %2642, %v2632
    %v2644 = vpop.permute.xlu0 %2643
    %2645 = vset.pattern.permute.xlu0 0
    %2646 = vperm.xlu0 %2645, %v2637
    %v2647 = vpop.permute.xlu0 %2646
    %v2648 = vlaneseq
    %v2649 = vshrl.u32 %v2648, 7
    %v2650 = vsub.s32 %v1584, %v2649
    %v2651 = vrot.slane %v2644, %v2650
    %v2652 = vlaneseq
    %v2653 = vshrl.u32 %v2652, 7
    %v2654 = vsub.s32 %v1584, %v2653
    %v2655 = vrot.slane %v2647, %v2654
    %v2656 = vsel %vm1593, %v2655, %v2651
    %2658 = vst.msk [vmem:[#allocation2] sm:$0x3] %vm1596, %v2656
    // Predicated region
    $region54: #{tpu_custom_call.1} parent=1 // pred_check
      _
    $region55: #{tpu_custom_call.1} parent=1 // pred_check_branch
      %2660 = sbr.rel (0) target = $region57
    $region56: #{tpu_custom_call.1} parent=1 // pred_region
      %s2662 = ssub.s32 32, 32
      %2663 = vsyncadd [#allocation3], %s2662
      %s2665 = sshll.u32 [#allocation2], 4
      %s2666 = int_to_ptr.vmem [resolvable:$true] %s2665
      %2668 = dma.vmem_to_hbm [thread:$0]  %s2666, 32, %s13, [#allocation3]
    $region57: #{tpu_custom_call.1} parent=1 // pred_fallthru
      _
    // Predicated region
    $region58: #{tpu_custom_call.1} parent=1 // pred_check
      _
    $region59: #{tpu_custom_call.1} parent=1 // pred_check_branch
      %2670 = sbr.rel (0) target = $region61
    $region60: #{tpu_custom_call.1} parent=1 // pred_region
      %2671 = dma.done [#allocation3], 32
    $region61: #{tpu_custom_call.1} parent=1 // pred_fallthru
      _
    %2672 = vsyncpa [#allocation3], 1

</llo_original>
